<compile_context>
chip_gen: v7x
topology: tpu7x:2x2x1
jax: 0.10.0
libtpu: 0.0.40
codegen_flags: <defaults>
</compile_context>

<pallas_src>
import functools
import math

import jax
import jax.numpy as jnp
from jax.experimental import pallas as pl
from jax.experimental.pallas import tpu as pltpu


# --------------------------- fused decoder-layer kernel ---------------------------

def _decoder_layer_kernel(x_ref, mem_ref, sbias_ref, mbias_ref,
                          sa_w, sa_b, sa_ow, sa_ob,
                          ca_qw, ca_qb, ca_kvw, ca_kvb, ca_ow, ca_ob,
                          ff1w, ff1b, ff2w, ff2b,
                          ln1g, ln1b, ln2g, ln2b, ln3g, ln3b,
                          o_ref, attn_sc, *, nhead):
    _, T, E = x_ref.shape
    S = mem_ref.shape[1]
    hd = E // nhead
    scale = 1.0 / math.sqrt(hd)

    def layer_norm(y, g_ref, b_ref):
        mu = jnp.mean(y, axis=-1, keepdims=True)
        var = jnp.mean(jnp.square(y - mu), axis=-1, keepdims=True)
        return (y - mu) * jax.lax.rsqrt(var + 1e-5) * g_ref[...] + b_ref[...]

    def softmax(s):
        m = jnp.max(s, axis=-1, keepdims=True)
        p = jnp.exp(s - m)
        return p * pl.reciprocal(jnp.sum(p, axis=-1, keepdims=True), approx=True)

    def matmul(a, w_ref, b_ref):
        return jnp.dot(a, w_ref[...], preferred_element_type=jnp.float32) + b_ref[...]

    def attend(q_rows, k_rows, v_rows, bias, h):
        # per-head 2-D slices; scores via dot_general (no explicit k transpose)
        q = q_rows[:, h * hd:(h + 1) * hd]
        k = k_rows[:, h * hd:(h + 1) * hd]
        v = v_rows[:, h * hd:(h + 1) * hd]
        s = jax.lax.dot_general(q, k, (((1,), (1,)), ((), ())),
                                preferred_element_type=jnp.float32) * scale + bias
        attn_sc[:, h * hd:(h + 1) * hd] = jnp.dot(
            softmax(s), v, preferred_element_type=jnp.float32)

    x = x_ref[0]           # (T, E)   current batch element
    mem = mem_ref[0]       # (S, E)
    sbias = sbias_ref[0]   # (T, T)   causal + tgt key-padding additive bias
    mbias = mbias_ref[0]   # (1, S)   memory key-padding additive bias

    # ---- self-attention: packed QKV projection (single MXU matmul) ----
    qkv = matmul(x, sa_w, sa_b)                       # (T, 3E)
    for h in range(nhead):
        attend(qkv[:, :E], qkv[:, E:2 * E], qkv[:, 2 * E:], sbias, h)
    x = layer_norm(x + matmul(attn_sc[...], sa_ow, sa_ob), ln1g, ln1b)

    # ---- cross-attention: packed KV projection of memory ----
    q_all = matmul(x, ca_qw, ca_qb)                   # (T, E)
    kv = matmul(mem, ca_kvw, ca_kvb)                  # (S, 2E)
    for h in range(nhead):
        attend(q_all, kv[:, :E], kv[:, E:], mbias, h)
    x = layer_norm(x + matmul(attn_sc[...], ca_ow, ca_ob), ln2g, ln2b)

    # ---- feed-forward: linear -> relu -> linear, hidden stays in VMEM ----
    hidden = jnp.maximum(matmul(x, ff1w, ff1b), 0.0)
    x = layer_norm(x + matmul(hidden, ff2w, ff2b), ln3g, ln3b)

    o_ref[0] = x


def fused_decoder_layer(x, mem, self_bias, mem_bias, p, nhead):
    """x: (B, T, E), mem: (B, S, E), self_bias: (B, T, T), mem_bias: (B, 1, S)."""
    B, T, E = x.shape
    S = mem.shape[1]

    def rep(shape):  # weight replicated across the batch grid
        return pl.BlockSpec(shape, lambda b, _n=len(shape): (0,) * _n)

    weights = (p["sa_in_w"], p["sa_in_b"], p["sa_out_w"], p["sa_out_b"],
               p["ca_q_w"], p["ca_q_b"], p["ca_kv_w"], p["ca_kv_b"],
               p["ca_out_w"], p["ca_out_b"],
               p["ff1_w"], p["ff1_b"], p["ff2_w"], p["ff2_b"],
               p["ln1_g"], p["ln1_b"], p["ln2_g"], p["ln2_b"], p["ln3_g"], p["ln3_b"])

    in_specs = ([pl.BlockSpec((1, T, E), lambda b: (b, 0, 0)),
                 pl.BlockSpec((1, S, E), lambda b: (b, 0, 0)),
                 pl.BlockSpec((1, T, T), lambda b: (b, 0, 0)),
                 pl.BlockSpec((1, 1, S), lambda b: (b, 0, 0))]
                + [rep(w.shape) for w in weights])

    return pl.pallas_call(
        functools.partial(_decoder_layer_kernel, nhead=nhead),
        out_shape=jax.ShapeDtypeStruct((B, T, E), jnp.float32),
        grid=(B,),
        in_specs=in_specs,
        out_specs=pl.BlockSpec((1, T, E), lambda b: (b, 0, 0)),
        scratch_shapes=[pltpu.VMEM((T, E), jnp.float32)],
        compiler_params=pltpu.CompilerParams(
            dimension_semantics=("parallel",)),   # shards batch over v7x's 2 TCs
    )(x, mem, self_bias, mem_bias, *weights)


# ----------------------- embedding scale + positional encoding -----------------------

def _embed_pe_kernel(emb_ref, pe_ref, o_ref, *, scale):
    # pe is (1, T, E); broadcast over the batch dim happens inside the kernel.
    o_ref[...] = emb_ref[...] * scale + pe_ref[...]


def embed_scale_pe(emb_bte, pe_1te, scale):
    B, T, E = emb_bte.shape
    return pl.pallas_call(
        functools.partial(_embed_pe_kernel, scale=scale),
        out_shape=jax.ShapeDtypeStruct((B, T, E), jnp.float32),
    )(emb_bte, pe_1te)


# ------------------------------------ model glue ------------------------------------

def positional_encoding(seq_len, d_model):
    position = jnp.arange(seq_len, dtype=jnp.float32)[:, None]
    div_term = jnp.exp(jnp.arange(0, d_model, 2, dtype=jnp.float32)
                       * (-math.log(10000.0) / d_model))
    pe = jnp.zeros((seq_len, d_model), jnp.float32)
    pe = pe.at[:, 0::2].set(jnp.sin(position * div_term))
    pe = pe.at[:, 1::2].set(jnp.cos(position * div_term))
    return pe[None, :, :]                                   # (1, T, E)


def transformer_decoder_forward(params, tgt_tokens, memory, tgt_mask,
                                tgt_padding_mask, memory_key_padding_mask, nhead):
    T, B = tgt_tokens.shape
    E = params["embedding"].shape[1]
    NEG = -1e9

    # embedding gather (XLA) directly into batch-major layout, then fused scale+PE
    emb = jnp.take(params["embedding"], tgt_tokens.T, axis=0)          # (B, T, E)
    x = embed_scale_pe(emb, positional_encoding(T, E), math.sqrt(E))   # (B, T, E)

    mem = memory.transpose(1, 0, 2)                                    # (B, S, E)

    # tiny additive attention biases shared by all layers (no per-head broadcast)
    self_bias = (tgt_mask[None, :, :]
                 + jnp.where(tgt_padding_mask[:, None, :], NEG, 0.0)).astype(jnp.float32)
    mem_bias = jnp.where(memory_key_padding_mask[:, None, :], NEG, 0.0).astype(jnp.float32)

    for p in params["layers"]:
        x = fused_decoder_layer(x, mem, self_bias, mem_bias, p, nhead)

    # nn.TransformerDecoder(norm=None) -> no final norm; back to (T, B, E)
    return x.transpose(1, 0, 2)


def init_params(key, vocab_size, emb_size, nhead, num_layers, dim_feedforward):
    keys = jax.random.split(key, 1 + num_layers)
    E, F = emb_size, dim_feedforward
    params = {
        "embedding": jax.random.normal(keys[0], (vocab_size, E), jnp.float32) * 0.02,
        "layers": [],
    }
    for l in range(num_layers):
        k = jax.random.split(keys[1 + l], 7)
        # weights stored pre-transposed as (in, out); biases / LN params as (1, N)
        p = {
            "sa_in_w": jax.random.normal(k[0], (E, 3 * E), jnp.float32) * 0.02,
            "sa_in_b": jnp.zeros((1, 3 * E), jnp.float32),
            "sa_out_w": jax.random.normal(k[1], (E, E), jnp.float32) * 0.02,
            "sa_out_b": jnp.zeros((1, E), jnp.float32),
            "ca_q_w": jax.random.normal(k[2], (E, E), jnp.float32) * 0.02,
            "ca_q_b": jnp.zeros((1, E), jnp.float32),
            "ca_kv_w": jax.random.normal(k[3], (E, 2 * E), jnp.float32) * 0.02,
            "ca_kv_b": jnp.zeros((1, 2 * E), jnp.float32),
            "ca_out_w": jax.random.normal(k[4], (E, E), jnp.float32) * 0.02,
            "ca_out_b": jnp.zeros((1, E), jnp.float32),
            "ff1_w": jax.random.normal(k[5], (E, F), jnp.float32) * 0.02,
            "ff1_b": jnp.zeros((1, F), jnp.float32),
            "ff2_w": jax.random.normal(k[6], (F, E), jnp.float32) * 0.02,
            "ff2_b": jnp.zeros((1, E), jnp.float32),
            "ln1_g": jnp.ones((1, E), jnp.float32), "ln1_b": jnp.zeros((1, E), jnp.float32),
            "ln2_g": jnp.ones((1, E), jnp.float32), "ln2_b": jnp.zeros((1, E), jnp.float32),
            "ln3_g": jnp.ones((1, E), jnp.float32), "ln3_b": jnp.zeros((1, E), jnp.float32),
        }
        params["layers"].append(p)
    return params


if __name__ == "__main__":
    vocab_size, emb_size, nhead, num_layers, dim_feedforward, dropout = 50, 32, 2, 2, 64, 0.1
    T, B, S = 8, 2, 8  # tgt seq len, batch, memory seq len

    key = jax.random.PRNGKey(0)
    kp, kt, km = jax.random.split(key, 3)
    params = init_params(kp, vocab_size, emb_size, nhead, num_layers, dim_feedforward)

    tgt = jax.random.randint(kt, (T, B), 0, vocab_size)                # token ids (seq, batch)
    memory = jax.random.normal(km, (S, B, emb_size), jnp.float32)      # (seq, batch, emb)

    # float additive causal mask (PyTorch generate_square_subsequent_mask style)
    causal = jnp.where(jnp.triu(jnp.ones((T, T), jnp.bool_), k=1), -1e9, 0.0).astype(jnp.float32)
    tgt_padding_mask = jnp.zeros((B, T), jnp.bool_).at[1, T - 1].set(True)
    memory_key_padding_mask = jnp.zeros((B, S), jnp.bool_).at[0, S - 1].set(True)

    fwd = jax.jit(functools.partial(transformer_decoder_forward, nhead=nhead))
    out = fwd(params, tgt, memory, causal, tgt_padding_mask, memory_key_padding_mask)
    out = jax.block_until_ready(out)
    assert out.shape == (T, B, emb_size) and out.dtype == jnp.float32
    print("KERNEL_OK")
</pallas_src>

<mosaic_0001>
module attributes {stable_mosaic.version = 11 : i64} {
  func.func @_embed_pe_kernel(%arg0: memref<2x8x32xf32, #tpu.memory_space<vmem>>, %arg1: memref<1x8x32xf32, #tpu.memory_space<vmem>>, %arg2: memref<2x8x32xf32, #tpu.memory_space<vmem>>) attributes {dimension_semantics = [], scalar_prefetch = 0 : i64, scratch_operands = 0 : i64, tpu.core_type = #tpu.core_type<tc>} {
    %c0 = arith.constant 0 : index
    %c0_0 = arith.constant 0 : index
    %c0_1 = arith.constant 0 : index
    %0 = vector.load %arg0[%c0, %c0_0, %c0_1] : memref<2x8x32xf32, #tpu.memory_space<vmem>>, vector<2x8x32xf32>
    %cst = arith.constant 5.65685415 : f32
    %1 = vector.broadcast %cst : f32 to vector<2x8x32xf32>
    %2 = arith.mulf %0, %1 : vector<2x8x32xf32>
    %c0_2 = arith.constant 0 : index
    %c0_3 = arith.constant 0 : index
    %c0_4 = arith.constant 0 : index
    %3 = vector.load %arg1[%c0_2, %c0_3, %c0_4] : memref<1x8x32xf32, #tpu.memory_space<vmem>>, vector<1x8x32xf32>
    %4 = vector.broadcast %3 : vector<1x8x32xf32> to vector<2x8x32xf32>
    %5 = arith.addf %2, %4 : vector<2x8x32xf32>
    %c0_5 = arith.constant 0 : index
    %c0_6 = arith.constant 0 : index
    %c0_7 = arith.constant 0 : index
    %6 = vector.load %arg2[%c0_5, %c0_6, %c0_7] : memref<2x8x32xf32, #tpu.memory_space<vmem>>, vector<2x8x32xf32>
    tpu.vector_store %arg2[%c0_5, %c0_6, %c0_7], %5 {strides = array<i32>} : memref<2x8x32xf32, #tpu.memory_space<vmem>>, vector<2x8x32xf32>,
    return
  }
}

module attributes {stable_mosaic.version = 11 : i64} {
  func.func @_decoder_layer_kernel(%arg0: i32, %arg1: memref<1x8x32xf32, #tpu.memory_space<vmem>>, %arg2: memref<1x8x32xf32, #tpu.memory_space<vmem>>, %arg3: memref<1x8x8xf32, #tpu.memory_space<vmem>>, %arg4: memref<1x1x8xf32, #tpu.memory_space<vmem>>, %arg5: memref<32x96xf32, #tpu.memory_space<vmem>>, %arg6: memref<1x96xf32, #tpu.memory_space<vmem>>, %arg7: memref<32x32xf32, #tpu.memory_space<vmem>>, %arg8: memref<1x32xf32, #tpu.memory_space<vmem>>, %arg9: memref<32x32xf32, #tpu.memory_space<vmem>>, %arg10: memref<1x32xf32, #tpu.memory_space<vmem>>, %arg11: memref<32x64xf32, #tpu.memory_space<vmem>>, %arg12: memref<1x64xf32, #tpu.memory_space<vmem>>, %arg13: memref<32x32xf32, #tpu.memory_space<vmem>>, %arg14: memref<1x32xf32, #tpu.memory_space<vmem>>, %arg15: memref<32x64xf32, #tpu.memory_space<vmem>>, %arg16: memref<1x64xf32, #tpu.memory_space<vmem>>, %arg17: memref<64x32xf32, #tpu.memory_space<vmem>>, %arg18: memref<1x32xf32, #tpu.memory_space<vmem>>, %arg19: memref<1x32xf32, #tpu.memory_space<vmem>>, %arg20: memref<1x32xf32, #tpu.memory_space<vmem>>, %arg21: memref<1x32xf32, #tpu.memory_space<vmem>>, %arg22: memref<1x32xf32, #tpu.memory_space<vmem>>, %arg23: memref<1x32xf32, #tpu.memory_space<vmem>>, %arg24: memref<1x32xf32, #tpu.memory_space<vmem>>, %arg25: memref<1x8x32xf32, #tpu.memory_space<vmem>>, %arg26: memref<8x32xf32, #tpu.memory_space<vmem>>) attributes {dimension_semantics = [#tpu.dimension_semantics<parallel>], iteration_bounds = array<i64: 2>, scalar_prefetch = 0 : i64, scratch_operands = 1 : i64, tpu.core_type = #tpu.core_type<tc>, window_params = [{transform_indices = @transform_0, window_bounds = array<i64: 1, 8, 32>}, {transform_indices = @transform_1, window_bounds = array<i64: 1, 8, 32>}, {transform_indices = @transform_2, window_bounds = array<i64: 1, 8, 8>}, {transform_indices = @transform_3, window_bounds = array<i64: 1, 1, 8>}, {pipeline_mode = #tpu.pipeline_mode<synchronous>, transform_indices = @transform_4, window_bounds = array<i64: 32, 96>}, {pipeline_mode = #tpu.pipeline_mode<synchronous>, transform_indices = @transform_5, window_bounds = array<i64: 1, 96>}, {pipeline_mode = #tpu.pipeline_mode<synchronous>, transform_indices = @transform_6, window_bounds = array<i64: 32, 32>}, {pipeline_mode = #tpu.pipeline_mode<synchronous>, transform_indices = @transform_7, window_bounds = array<i64: 1, 32>}, {pipeline_mode = #tpu.pipeline_mode<synchronous>, transform_indices = @transform_8, window_bounds = array<i64: 32, 32>}, {pipeline_mode = #tpu.pipeline_mode<synchronous>, transform_indices = @transform_9, window_bounds = array<i64: 1, 32>}, {pipeline_mode = #tpu.pipeline_mode<synchronous>, transform_indices = @transform_10, window_bounds = array<i64: 32, 64>}, {pipeline_mode = #tpu.pipeline_mode<synchronous>, transform_indices = @transform_11, window_bounds = array<i64: 1, 64>}, {pipeline_mode = #tpu.pipeline_mode<synchronous>, transform_indices = @transform_12, window_bounds = array<i64: 32, 32>}, {pipeline_mode = #tpu.pipeline_mode<synchronous>, transform_indices = @transform_13, window_bounds = array<i64: 1, 32>}, {pipeline_mode = #tpu.pipeline_mode<synchronous>, transform_indices = @transform_14, window_bounds = array<i64: 32, 64>}, {pipeline_mode = #tpu.pipeline_mode<synchronous>, transform_indices = @transform_15, window_bounds = array<i64: 1, 64>}, {pipeline_mode = #tpu.pipeline_mode<synchronous>, transform_indices = @transform_16, window_bounds = array<i64: 64, 32>}, {pipeline_mode = #tpu.pipeline_mode<synchronous>, transform_indices = @transform_17, window_bounds = array<i64: 1, 32>}, {pipeline_mode = #tpu.pipeline_mode<synchronous>, transform_indices = @transform_18, window_bounds = array<i64: 1, 32>}, {pipeline_mode = #tpu.pipeline_mode<synchronous>, transform_indices = @transform_19, window_bounds = array<i64: 1, 32>}, {pipeline_mode = #tpu.pipeline_mode<synchronous>, transform_indices = @transform_20, window_bounds = array<i64: 1, 32>}, {pipeline_mode = #tpu.pipeline_mode<synchronous>, transform_indices = @transform_21, window_bounds = array<i64: 1, 32>}, {pipeline_mode = #tpu.pipeline_mode<synchronous>, transform_indices = @transform_22, window_bounds = array<i64: 1, 32>}, {pipeline_mode = #tpu.pipeline_mode<synchronous>, transform_indices = @transform_23, window_bounds = array<i64: 1, 32>}, {transform_indices = @transform_24, window_bounds = array<i64: 1, 8, 32>}]} {
    %c0 = arith.constant 0 : index
    %c0_0 = arith.constant 0 : index
    %c0_1 = arith.constant 0 : index
    %0 = vector.load %arg1[%c0, %c0_0, %c0_1] : memref<1x8x32xf32, #tpu.memory_space<vmem>>, vector<1x8x32xf32>
    %1 = vector.shape_cast %0 : vector<1x8x32xf32> to vector<8x32xf32>
    %c0_2 = arith.constant 0 : index
    %c0_3 = arith.constant 0 : index
    %c0_4 = arith.constant 0 : index
    %2 = vector.load %arg2[%c0_2, %c0_3, %c0_4] : memref<1x8x32xf32, #tpu.memory_space<vmem>>, vector<1x8x32xf32>
    %3 = vector.shape_cast %2 : vector<1x8x32xf32> to vector<8x32xf32>
    %c0_5 = arith.constant 0 : index
    %c0_6 = arith.constant 0 : index
    %c0_7 = arith.constant 0 : index
    %4 = vector.load %arg3[%c0_5, %c0_6, %c0_7] : memref<1x8x8xf32, #tpu.memory_space<vmem>>, vector<1x8x8xf32>
    %5 = vector.shape_cast %4 : vector<1x8x8xf32> to vector<8x8xf32>
    %c0_8 = arith.constant 0 : index
    %c0_9 = arith.constant 0 : index
    %c0_10 = arith.constant 0 : index
    %6 = vector.load %arg4[%c0_8, %c0_9, %c0_10] : memref<1x1x8xf32, #tpu.memory_space<vmem>>, vector<1x1x8xf32>
    %7 = vector.shape_cast %6 : vector<1x1x8xf32> to vector<1x8xf32>
    %c0_11 = arith.constant 0 : index
    %c0_12 = arith.constant 0 : index
    %8 = vector.load %arg5[%c0_11, %c0_12] : memref<32x96xf32, #tpu.memory_space<vmem>>, vector<32x96xf32>
    %cst = arith.constant dense<0.000000e+00> : vector<8x96xf32>
    %9 = tpu.matmul %1, %8, %cst {dimension_numbers = #tpu.dot_dimension_numbers<[1], [0], [0], [1], [0, 0, 1, 1], [], []>} : vector<8x32xf32>, vector<32x96xf32>, vector<8x96xf32> -> vector<8x96xf32>
    %c0_13 = arith.constant 0 : index
    %c0_14 = arith.constant 0 : index
    %10 = vector.load %arg6[%c0_13, %c0_14] : memref<1x96xf32, #tpu.memory_space<vmem>>, vector<1x96xf32>
    %11 = vector.broadcast %10 : vector<1x96xf32> to vector<8x96xf32>
    %12 = arith.addf %9, %11 : vector<8x96xf32>
    %13 = vector.extract_strided_slice %12 {offsets = [0, 0], sizes = [8, 32], strides = [1, 1]} : vector<8x96xf32> to vector<8x32xf32>
    %14 = vector.extract_strided_slice %12 {offsets = [0, 32], sizes = [8, 32], strides = [1, 1]} : vector<8x96xf32> to vector<8x32xf32>
    %15 = vector.extract_strided_slice %12 {offsets = [0, 64], sizes = [8, 32], strides = [1, 1]} : vector<8x96xf32> to vector<8x32xf32>
    %16 = vector.extract_strided_slice %13 {offsets = [0, 0], sizes = [8, 16], strides = [1, 1]} : vector<8x32xf32> to vector<8x16xf32>
    %17 = vector.extract_strided_slice %14 {offsets = [0, 0], sizes = [8, 16], strides = [1, 1]} : vector<8x32xf32> to vector<8x16xf32>
    %18 = vector.extract_strided_slice %15 {offsets = [0, 0], sizes = [8, 16], strides = [1, 1]} : vector<8x32xf32> to vector<8x16xf32>
    %cst_15 = arith.constant dense<0.000000e+00> : vector<8x8xf32>
    %19 = tpu.matmul %16, %17, %cst_15 {dimension_numbers = #tpu.dot_dimension_numbers<[1], [1], [0], [0], [0, 0, 1, 0], [], []>} : vector<8x16xf32>, vector<8x16xf32>, vector<8x8xf32> -> vector<8x8xf32>
    %cst_16 = arith.constant 2.500000e-01 : f32
    %20 = vector.broadcast %cst_16 : f32 to vector<8x8xf32>
    %21 = arith.mulf %19, %20 : vector<8x8xf32>
    %22 = arith.addf %21, %5 : vector<8x8xf32>
    %cst_17 = arith.constant dense<0xFF800000> : vector<8xf32>
    %23 = vector.multi_reduction <maximumf>, %22, %cst_17 [1] : vector<8x8xf32> to vector<8xf32>
    %24 = vector.shape_cast %23 : vector<8xf32> to vector<8x1xf32>
    %25 = vector.broadcast %24 : vector<8x1xf32> to vector<8x8xf32>
    %26 = arith.subf %22, %25 : vector<8x8xf32>
    %27 = math.exp %26 : vector<8x8xf32>
    %cst_18 = arith.constant dense<0.000000e+00> : vector<8xf32>
    %28 = vector.multi_reduction <add>, %27, %cst_18 [1] : vector<8x8xf32> to vector<8xf32>
    %29 = vector.shape_cast %28 : vector<8xf32> to vector<8x1xf32>
    %30 = tpu.reciprocal %29 {approx = true} : vector<8x1xf32> -> vector<8x1xf32>
    %31 = vector.broadcast %30 : vector<8x1xf32> to vector<8x8xf32>
    %32 = arith.mulf %27, %31 : vector<8x8xf32>
    %cst_19 = arith.constant dense<0.000000e+00> : vector<8x16xf32>
    %33 = tpu.matmul %32, %18, %cst_19 {dimension_numbers = #tpu.dot_dimension_numbers<[1], [0], [0], [1], [0, 0, 1, 1], [], []>} : vector<8x8xf32>, vector<8x16xf32>, vector<8x16xf32> -> vector<8x16xf32>
    %c0_20 = arith.constant 0 : index
    %c0_21 = arith.constant 0 : index
    %34 = vector.load %arg26[%c0_20, %c0_21] : memref<8x32xf32, #tpu.memory_space<vmem>>, vector<8x16xf32>
    tpu.vector_store %arg26[%c0_20, %c0_21], %33 {strides = array<i32>} : memref<8x32xf32, #tpu.memory_space<vmem>>, vector<8x16xf32>,
    %35 = vector.extract_strided_slice %12 {offsets = [0, 0], sizes = [8, 32], strides = [1, 1]} : vector<8x96xf32> to vector<8x32xf32>
    %36 = vector.extract_strided_slice %12 {offsets = [0, 32], sizes = [8, 32], strides = [1, 1]} : vector<8x96xf32> to vector<8x32xf32>
    %37 = vector.extract_strided_slice %12 {offsets = [0, 64], sizes = [8, 32], strides = [1, 1]} : vector<8x96xf32> to vector<8x32xf32>
    %38 = vector.extract_strided_slice %35 {offsets = [0, 16], sizes = [8, 16], strides = [1, 1]} : vector<8x32xf32> to vector<8x16xf32>
    %39 = vector.extract_strided_slice %36 {offsets = [0, 16], sizes = [8, 16], strides = [1, 1]} : vector<8x32xf32> to vector<8x16xf32>
    %40 = vector.extract_strided_slice %37 {offsets = [0, 16], sizes = [8, 16], strides = [1, 1]} : vector<8x32xf32> to vector<8x16xf32>
    %cst_22 = arith.constant dense<0.000000e+00> : vector<8x8xf32>
    %41 = tpu.matmul %38, %39, %cst_22 {dimension_numbers = #tpu.dot_dimension_numbers<[1], [1], [0], [0], [0, 0, 1, 0], [], []>} : vector<8x16xf32>, vector<8x16xf32>, vector<8x8xf32> -> vector<8x8xf32>
    %cst_23 = arith.constant 2.500000e-01 : f32
    %42 = vector.broadcast %cst_23 : f32 to vector<8x8xf32>
    %43 = arith.mulf %41, %42 : vector<8x8xf32>
    %44 = arith.addf %43, %5 : vector<8x8xf32>
    %cst_24 = arith.constant dense<0xFF800000> : vector<8xf32>
    %45 = vector.multi_reduction <maximumf>, %44, %cst_24 [1] : vector<8x8xf32> to vector<8xf32>
    %46 = vector.shape_cast %45 : vector<8xf32> to vector<8x1xf32>
    %47 = vector.broadcast %46 : vector<8x1xf32> to vector<8x8xf32>
    %48 = arith.subf %44, %47 : vector<8x8xf32>
    %49 = math.exp %48 : vector<8x8xf32>
    %cst_25 = arith.constant dense<0.000000e+00> : vector<8xf32>
    %50 = vector.multi_reduction <add>, %49, %cst_25 [1] : vector<8x8xf32> to vector<8xf32>
    %51 = vector.shape_cast %50 : vector<8xf32> to vector<8x1xf32>
    %52 = tpu.reciprocal %51 {approx = true} : vector<8x1xf32> -> vector<8x1xf32>
    %53 = vector.broadcast %52 : vector<8x1xf32> to vector<8x8xf32>
    %54 = arith.mulf %49, %53 : vector<8x8xf32>
    %cst_26 = arith.constant dense<0.000000e+00> : vector<8x16xf32>
    %55 = tpu.matmul %54, %40, %cst_26 {dimension_numbers = #tpu.dot_dimension_numbers<[1], [0], [0], [1], [0, 0, 1, 1], [], []>} : vector<8x8xf32>, vector<8x16xf32>, vector<8x16xf32> -> vector<8x16xf32>
    %c0_27 = arith.constant 0 : index
    %c16 = arith.constant 16 : index
    %56 = vector.load %arg26[%c0_27, %c16] : memref<8x32xf32, #tpu.memory_space<vmem>>, vector<8x16xf32>
    tpu.vector_store %arg26[%c0_27, %c16], %55 {strides = array<i32>} : memref<8x32xf32, #tpu.memory_space<vmem>>, vector<8x16xf32>,
    %c0_28 = arith.constant 0 : index
    %c0_29 = arith.constant 0 : index
    %57 = vector.load %arg26[%c0_28, %c0_29] : memref<8x32xf32, #tpu.memory_space<vmem>>, vector<8x32xf32>
    %c0_30 = arith.constant 0 : index
    %c0_31 = arith.constant 0 : index
    %58 = vector.load %arg7[%c0_30, %c0_31] : memref<32x32xf32, #tpu.memory_space<vmem>>, vector<32x32xf32>
    %cst_32 = arith.constant dense<0.000000e+00> : vector<8x32xf32>
    %59 = tpu.matmul %57, %58, %cst_32 {dimension_numbers = #tpu.dot_dimension_numbers<[1], [0], [0], [1], [0, 0, 1, 1], [], []>} : vector<8x32xf32>, vector<32x32xf32>, vector<8x32xf32> -> vector<8x32xf32>
    %c0_33 = arith.constant 0 : index
    %c0_34 = arith.constant 0 : index
    %60 = vector.load %arg8[%c0_33, %c0_34] : memref<1x32xf32, #tpu.memory_space<vmem>>, vector<1x32xf32>
    %61 = vector.broadcast %60 : vector<1x32xf32> to vector<8x32xf32>
    %62 = arith.addf %59, %61 : vector<8x32xf32>
    %63 = arith.addf %1, %62 : vector<8x32xf32>
    %cst_35 = arith.constant dense<0.000000e+00> : vector<8xf32>
    %64 = vector.multi_reduction <add>, %63, %cst_35 [1] : vector<8x32xf32> to vector<8xf32>
    %65 = vector.shape_cast %64 : vector<8xf32> to vector<8x1xf32>
    %cst_36 = arith.constant 3.200000e+01 : f32
    %66 = vector.broadcast %cst_36 : f32 to vector<8x1xf32>
    %67 = arith.divf %65, %66 : vector<8x1xf32>
    %68 = vector.broadcast %67 : vector<8x1xf32> to vector<8x32xf32>
    %69 = arith.subf %63, %68 : vector<8x32xf32>
    %70 = arith.mulf %69, %69 : vector<8x32xf32>
    %cst_37 = arith.constant dense<0.000000e+00> : vector<8xf32>
    %71 = vector.multi_reduction <add>, %70, %cst_37 [1] : vector<8x32xf32> to vector<8xf32>
    %72 = vector.shape_cast %71 : vector<8xf32> to vector<8x1xf32>
    %cst_38 = arith.constant 3.200000e+01 : f32
    %73 = vector.broadcast %cst_38 : f32 to vector<8x1xf32>
    %74 = arith.divf %72, %73 : vector<8x1xf32>
    %75 = vector.broadcast %67 : vector<8x1xf32> to vector<8x32xf32>
    %76 = arith.subf %63, %75 : vector<8x32xf32>
    %cst_39 = arith.constant 9.99999974E-6 : f32
    %77 = vector.broadcast %cst_39 : f32 to vector<8x1xf32>
    %78 = arith.addf %74, %77 : vector<8x1xf32>
    %79 = math.rsqrt %78 : vector<8x1xf32>
    %80 = vector.broadcast %79 : vector<8x1xf32> to vector<8x32xf32>
    %81 = arith.mulf %76, %80 : vector<8x32xf32>
    %c0_40 = arith.constant 0 : index
    %c0_41 = arith.constant 0 : index
    %82 = vector.load %arg19[%c0_40, %c0_41] : memref<1x32xf32, #tpu.memory_space<vmem>>, vector<1x32xf32>
    %83 = vector.broadcast %82 : vector<1x32xf32> to vector<8x32xf32>
    %84 = arith.mulf %81, %83 : vector<8x32xf32>
    %c0_42 = arith.constant 0 : index
    %c0_43 = arith.constant 0 : index
    %85 = vector.load %arg20[%c0_42, %c0_43] : memref<1x32xf32, #tpu.memory_space<vmem>>, vector<1x32xf32>
    %86 = vector.broadcast %85 : vector<1x32xf32> to vector<8x32xf32>
    %87 = arith.addf %84, %86 : vector<8x32xf32>
    %c0_44 = arith.constant 0 : index
    %c0_45 = arith.constant 0 : index
    %88 = vector.load %arg9[%c0_44, %c0_45] : memref<32x32xf32, #tpu.memory_space<vmem>>, vector<32x32xf32>
    %cst_46 = arith.constant dense<0.000000e+00> : vector<8x32xf32>
    %89 = tpu.matmul %87, %88, %cst_46 {dimension_numbers = #tpu.dot_dimension_numbers<[1], [0], [0], [1], [0, 0, 1, 1], [], []>} : vector<8x32xf32>, vector<32x32xf32>, vector<8x32xf32> -> vector<8x32xf32>
    %c0_47 = arith.constant 0 : index
    %c0_48 = arith.constant 0 : index
    %90 = vector.load %arg10[%c0_47, %c0_48] : memref<1x32xf32, #tpu.memory_space<vmem>>, vector<1x32xf32>
    %91 = vector.broadcast %90 : vector<1x32xf32> to vector<8x32xf32>
    %92 = arith.addf %89, %91 : vector<8x32xf32>
    %c0_49 = arith.constant 0 : index
    %c0_50 = arith.constant 0 : index
    %93 = vector.load %arg11[%c0_49, %c0_50] : memref<32x64xf32, #tpu.memory_space<vmem>>, vector<32x64xf32>
    %cst_51 = arith.constant dense<0.000000e+00> : vector<8x64xf32>
    %94 = tpu.matmul %3, %93, %cst_51 {dimension_numbers = #tpu.dot_dimension_numbers<[1], [0], [0], [1], [0, 0, 1, 1], [], []>} : vector<8x32xf32>, vector<32x64xf32>, vector<8x64xf32> -> vector<8x64xf32>
    %c0_52 = arith.constant 0 : index
    %c0_53 = arith.constant 0 : index
    %95 = vector.load %arg12[%c0_52, %c0_53] : memref<1x64xf32, #tpu.memory_space<vmem>>, vector<1x64xf32>
    %96 = vector.broadcast %95 : vector<1x64xf32> to vector<8x64xf32>
    %97 = arith.addf %94, %96 : vector<8x64xf32>
    %98 = vector.extract_strided_slice %97 {offsets = [0, 0], sizes = [8, 32], strides = [1, 1]} : vector<8x64xf32> to vector<8x32xf32>
    %99 = vector.extract_strided_slice %97 {offsets = [0, 32], sizes = [8, 32], strides = [1, 1]} : vector<8x64xf32> to vector<8x32xf32>
    %100 = vector.extract_strided_slice %92 {offsets = [0, 0], sizes = [8, 16], strides = [1, 1]} : vector<8x32xf32> to vector<8x16xf32>
    %101 = vector.extract_strided_slice %98 {offsets = [0, 0], sizes = [8, 16], strides = [1, 1]} : vector<8x32xf32> to vector<8x16xf32>
    %102 = vector.extract_strided_slice %99 {offsets = [0, 0], sizes = [8, 16], strides = [1, 1]} : vector<8x32xf32> to vector<8x16xf32>
    %cst_54 = arith.constant dense<0.000000e+00> : vector<8x8xf32>
    %103 = tpu.matmul %100, %101, %cst_54 {dimension_numbers = #tpu.dot_dimension_numbers<[1], [1], [0], [0], [0, 0, 1, 0], [], []>} : vector<8x16xf32>, vector<8x16xf32>, vector<8x8xf32> -> vector<8x8xf32>
    %cst_55 = arith.constant 2.500000e-01 : f32
    %104 = vector.broadcast %cst_55 : f32 to vector<8x8xf32>
    %105 = arith.mulf %103, %104 : vector<8x8xf32>
    %106 = vector.broadcast %7 : vector<1x8xf32> to vector<8x8xf32>
    %107 = arith.addf %105, %106 : vector<8x8xf32>
    %cst_56 = arith.constant dense<0xFF800000> : vector<8xf32>
    %108 = vector.multi_reduction <maximumf>, %107, %cst_56 [1] : vector<8x8xf32> to vector<8xf32>
    %109 = vector.shape_cast %108 : vector<8xf32> to vector<8x1xf32>
    %110 = vector.broadcast %109 : vector<8x1xf32> to vector<8x8xf32>
    %111 = arith.subf %107, %110 : vector<8x8xf32>
    %112 = math.exp %111 : vector<8x8xf32>
    %cst_57 = arith.constant dense<0.000000e+00> : vector<8xf32>
    %113 = vector.multi_reduction <add>, %112, %cst_57 [1] : vector<8x8xf32> to vector<8xf32>
    %114 = vector.shape_cast %113 : vector<8xf32> to vector<8x1xf32>
    %115 = tpu.reciprocal %114 {approx = true} : vector<8x1xf32> -> vector<8x1xf32>
    %116 = vector.broadcast %115 : vector<8x1xf32> to vector<8x8xf32>
    %117 = arith.mulf %112, %116 : vector<8x8xf32>
    %cst_58 = arith.constant dense<0.000000e+00> : vector<8x16xf32>
    %118 = tpu.matmul %117, %102, %cst_58 {dimension_numbers = #tpu.dot_dimension_numbers<[1], [0], [0], [1], [0, 0, 1, 1], [], []>} : vector<8x8xf32>, vector<8x16xf32>, vector<8x16xf32> -> vector<8x16xf32>
    %c0_59 = arith.constant 0 : index
    %c0_60 = arith.constant 0 : index
    %119 = vector.load %arg26[%c0_59, %c0_60] : memref<8x32xf32, #tpu.memory_space<vmem>>, vector<8x16xf32>
    tpu.vector_store %arg26[%c0_59, %c0_60], %118 {strides = array<i32>} : memref<8x32xf32, #tpu.memory_space<vmem>>, vector<8x16xf32>,
    %120 = vector.extract_strided_slice %97 {offsets = [0, 0], sizes = [8, 32], strides = [1, 1]} : vector<8x64xf32> to vector<8x32xf32>
    %121 = vector.extract_strided_slice %97 {offsets = [0, 32], sizes = [8, 32], strides = [1, 1]} : vector<8x64xf32> to vector<8x32xf32>
    %122 = vector.extract_strided_slice %92 {offsets = [0, 16], sizes = [8, 16], strides = [1, 1]} : vector<8x32xf32> to vector<8x16xf32>
    %123 = vector.extract_strided_slice %120 {offsets = [0, 16], sizes = [8, 16], strides = [1, 1]} : vector<8x32xf32> to vector<8x16xf32>
    %124 = vector.extract_strided_slice %121 {offsets = [0, 16], sizes = [8, 16], strides = [1, 1]} : vector<8x32xf32> to vector<8x16xf32>
    %cst_61 = arith.constant dense<0.000000e+00> : vector<8x8xf32>
    %125 = tpu.matmul %122, %123, %cst_61 {dimension_numbers = #tpu.dot_dimension_numbers<[1], [1], [0], [0], [0, 0, 1, 0], [], []>} : vector<8x16xf32>, vector<8x16xf32>, vector<8x8xf32> -> vector<8x8xf32>
    %cst_62 = arith.constant 2.500000e-01 : f32
    %126 = vector.broadcast %cst_62 : f32 to vector<8x8xf32>
    %127 = arith.mulf %125, %126 : vector<8x8xf32>
    %128 = vector.broadcast %7 : vector<1x8xf32> to vector<8x8xf32>
    %129 = arith.addf %127, %128 : vector<8x8xf32>
    %cst_63 = arith.constant dense<0xFF800000> : vector<8xf32>
    %130 = vector.multi_reduction <maximumf>, %129, %cst_63 [1] : vector<8x8xf32> to vector<8xf32>
    %131 = vector.shape_cast %130 : vector<8xf32> to vector<8x1xf32>
    %132 = vector.broadcast %131 : vector<8x1xf32> to vector<8x8xf32>
    %133 = arith.subf %129, %132 : vector<8x8xf32>
    %134 = math.exp %133 : vector<8x8xf32>
    %cst_64 = arith.constant dense<0.000000e+00> : vector<8xf32>
    %135 = vector.multi_reduction <add>, %134, %cst_64 [1] : vector<8x8xf32> to vector<8xf32>
    %136 = vector.shape_cast %135 : vector<8xf32> to vector<8x1xf32>
    %137 = tpu.reciprocal %136 {approx = true} : vector<8x1xf32> -> vector<8x1xf32>
    %138 = vector.broadcast %137 : vector<8x1xf32> to vector<8x8xf32>
    %139 = arith.mulf %134, %138 : vector<8x8xf32>
    %cst_65 = arith.constant dense<0.000000e+00> : vector<8x16xf32>
    %140 = tpu.matmul %139, %124, %cst_65 {dimension_numbers = #tpu.dot_dimension_numbers<[1], [0], [0], [1], [0, 0, 1, 1], [], []>} : vector<8x8xf32>, vector<8x16xf32>, vector<8x16xf32> -> vector<8x16xf32>
    %c0_66 = arith.constant 0 : index
    %c16_67 = arith.constant 16 : index
    %141 = vector.load %arg26[%c0_66, %c16_67] : memref<8x32xf32, #tpu.memory_space<vmem>>, vector<8x16xf32>
    tpu.vector_store %arg26[%c0_66, %c16_67], %140 {strides = array<i32>} : memref<8x32xf32, #tpu.memory_space<vmem>>, vector<8x16xf32>,
    %c0_68 = arith.constant 0 : index
    %c0_69 = arith.constant 0 : index
    %142 = vector.load %arg26[%c0_68, %c0_69] : memref<8x32xf32, #tpu.memory_space<vmem>>, vector<8x32xf32>
    %c0_70 = arith.constant 0 : index
    %c0_71 = arith.constant 0 : index
    %143 = vector.load %arg13[%c0_70, %c0_71] : memref<32x32xf32, #tpu.memory_space<vmem>>, vector<32x32xf32>
    %cst_72 = arith.constant dense<0.000000e+00> : vector<8x32xf32>
    %144 = tpu.matmul %142, %143, %cst_72 {dimension_numbers = #tpu.dot_dimension_numbers<[1], [0], [0], [1], [0, 0, 1, 1], [], []>} : vector<8x32xf32>, vector<32x32xf32>, vector<8x32xf32> -> vector<8x32xf32>
    %c0_73 = arith.constant 0 : index
    %c0_74 = arith.constant 0 : index
    %145 = vector.load %arg14[%c0_73, %c0_74] : memref<1x32xf32, #tpu.memory_space<vmem>>, vector<1x32xf32>
    %146 = vector.broadcast %145 : vector<1x32xf32> to vector<8x32xf32>
    %147 = arith.addf %144, %146 : vector<8x32xf32>
    %148 = arith.addf %87, %147 : vector<8x32xf32>
    %cst_75 = arith.constant dense<0.000000e+00> : vector<8xf32>
    %149 = vector.multi_reduction <add>, %148, %cst_75 [1] : vector<8x32xf32> to vector<8xf32>
    %150 = vector.shape_cast %149 : vector<8xf32> to vector<8x1xf32>
    %cst_76 = arith.constant 3.200000e+01 : f32
    %151 = vector.broadcast %cst_76 : f32 to vector<8x1xf32>
    %152 = arith.divf %150, %151 : vector<8x1xf32>
    %153 = vector.broadcast %152 : vector<8x1xf32> to vector<8x32xf32>
    %154 = arith.subf %148, %153 : vector<8x32xf32>
    %155 = arith.mulf %154, %154 : vector<8x32xf32>
    %cst_77 = arith.constant dense<0.000000e+00> : vector<8xf32>
    %156 = vector.multi_reduction <add>, %155, %cst_77 [1] : vector<8x32xf32> to vector<8xf32>
    %157 = vector.shape_cast %156 : vector<8xf32> to vector<8x1xf32>
    %cst_78 = arith.constant 3.200000e+01 : f32
    %158 = vector.broadcast %cst_78 : f32 to vector<8x1xf32>
    %159 = arith.divf %157, %158 : vector<8x1xf32>
    %160 = vector.broadcast %152 : vector<8x1xf32> to vector<8x32xf32>
    %161 = arith.subf %148, %160 : vector<8x32xf32>
    %cst_79 = arith.constant 9.99999974E-6 : f32
    %162 = vector.broadcast %cst_79 : f32 to vector<8x1xf32>
    %163 = arith.addf %159, %162 : vector<8x1xf32>
    %164 = math.rsqrt %163 : vector<8x1xf32>
    %165 = vector.broadcast %164 : vector<8x1xf32> to vector<8x32xf32>
    %166 = arith.mulf %161, %165 : vector<8x32xf32>
    %c0_80 = arith.constant 0 : index
    %c0_81 = arith.constant 0 : index
    %167 = vector.load %arg21[%c0_80, %c0_81] : memref<1x32xf32, #tpu.memory_space<vmem>>, vector<1x32xf32>
    %168 = vector.broadcast %167 : vector<1x32xf32> to vector<8x32xf32>
    %169 = arith.mulf %166, %168 : vector<8x32xf32>
    %c0_82 = arith.constant 0 : index
    %c0_83 = arith.constant 0 : index
    %170 = vector.load %arg22[%c0_82, %c0_83] : memref<1x32xf32, #tpu.memory_space<vmem>>, vector<1x32xf32>
    %171 = vector.broadcast %170 : vector<1x32xf32> to vector<8x32xf32>
    %172 = arith.addf %169, %171 : vector<8x32xf32>
    %c0_84 = arith.constant 0 : index
    %c0_85 = arith.constant 0 : index
    %173 = vector.load %arg15[%c0_84, %c0_85] : memref<32x64xf32, #tpu.memory_space<vmem>>, vector<32x64xf32>
    %cst_86 = arith.constant dense<0.000000e+00> : vector<8x64xf32>
    %174 = tpu.matmul %172, %173, %cst_86 {dimension_numbers = #tpu.dot_dimension_numbers<[1], [0], [0], [1], [0, 0, 1, 1], [], []>} : vector<8x32xf32>, vector<32x64xf32>, vector<8x64xf32> -> vector<8x64xf32>
    %c0_87 = arith.constant 0 : index
    %c0_88 = arith.constant 0 : index
    %175 = vector.load %arg16[%c0_87, %c0_88] : memref<1x64xf32, #tpu.memory_space<vmem>>, vector<1x64xf32>
    %176 = vector.broadcast %175 : vector<1x64xf32> to vector<8x64xf32>
    %177 = arith.addf %174, %176 : vector<8x64xf32>
    %cst_89 = arith.constant 0.000000e+00 : f32
    %178 = vector.broadcast %cst_89 : f32 to vector<8x64xf32>
    %179 = arith.maximumf %177, %178 : vector<8x64xf32>
    %c0_90 = arith.constant 0 : index
    %c0_91 = arith.constant 0 : index
    %180 = vector.load %arg17[%c0_90, %c0_91] : memref<64x32xf32, #tpu.memory_space<vmem>>, vector<64x32xf32>
    %cst_92 = arith.constant dense<0.000000e+00> : vector<8x32xf32>
    %181 = tpu.matmul %179, %180, %cst_92 {dimension_numbers = #tpu.dot_dimension_numbers<[1], [0], [0], [1], [0, 0, 1, 1], [], []>} : vector<8x64xf32>, vector<64x32xf32>, vector<8x32xf32> -> vector<8x32xf32>
    %c0_93 = arith.constant 0 : index
    %c0_94 = arith.constant 0 : index
    %182 = vector.load %arg18[%c0_93, %c0_94] : memref<1x32xf32, #tpu.memory_space<vmem>>, vector<1x32xf32>
    %183 = vector.broadcast %182 : vector<1x32xf32> to vector<8x32xf32>
    %184 = arith.addf %181, %183 : vector<8x32xf32>
    %185 = arith.addf %172, %184 : vector<8x32xf32>
    %cst_95 = arith.constant dense<0.000000e+00> : vector<8xf32>
    %186 = vector.multi_reduction <add>, %185, %cst_95 [1] : vector<8x32xf32> to vector<8xf32>
    %187 = vector.shape_cast %186 : vector<8xf32> to vector<8x1xf32>
    %cst_96 = arith.constant 3.200000e+01 : f32
    %188 = vector.broadcast %cst_96 : f32 to vector<8x1xf32>
    %189 = arith.divf %187, %188 : vector<8x1xf32>
    %190 = vector.broadcast %189 : vector<8x1xf32> to vector<8x32xf32>
    %191 = arith.subf %185, %190 : vector<8x32xf32>
    %192 = arith.mulf %191, %191 : vector<8x32xf32>
    %cst_97 = arith.constant dense<0.000000e+00> : vector<8xf32>
    %193 = vector.multi_reduction <add>, %192, %cst_97 [1] : vector<8x32xf32> to vector<8xf32>
    %194 = vector.shape_cast %193 : vector<8xf32> to vector<8x1xf32>
    %cst_98 = arith.constant 3.200000e+01 : f32
    %195 = vector.broadcast %cst_98 : f32 to vector<8x1xf32>
    %196 = arith.divf %194, %195 : vector<8x1xf32>
    %197 = vector.broadcast %189 : vector<8x1xf32> to vector<8x32xf32>
    %198 = arith.subf %185, %197 : vector<8x32xf32>
    %cst_99 = arith.constant 9.99999974E-6 : f32
    %199 = vector.broadcast %cst_99 : f32 to vector<8x1xf32>
    %200 = arith.addf %196, %199 : vector<8x1xf32>
    %201 = math.rsqrt %200 : vector<8x1xf32>
    %202 = vector.broadcast %201 : vector<8x1xf32> to vector<8x32xf32>
    %203 = arith.mulf %198, %202 : vector<8x32xf32>
    %c0_100 = arith.constant 0 : index
    %c0_101 = arith.constant 0 : index
    %204 = vector.load %arg23[%c0_100, %c0_101] : memref<1x32xf32, #tpu.memory_space<vmem>>, vector<1x32xf32>
    %205 = vector.broadcast %204 : vector<1x32xf32> to vector<8x32xf32>
    %206 = arith.mulf %203, %205 : vector<8x32xf32>
    %c0_102 = arith.constant 0 : index
    %c0_103 = arith.constant 0 : index
    %207 = vector.load %arg24[%c0_102, %c0_103] : memref<1x32xf32, #tpu.memory_space<vmem>>, vector<1x32xf32>
    %208 = vector.broadcast %207 : vector<1x32xf32> to vector<8x32xf32>
    %209 = arith.addf %206, %208 : vector<8x32xf32>
    %c0_104 = arith.constant 0 : index
    %c0_105 = arith.constant 0 : index
    %c0_106 = arith.constant 0 : index
    %210 = vector.load %arg25[%c0_104, %c0_105, %c0_106] : memref<1x8x32xf32, #tpu.memory_space<vmem>>, vector<1x8x32xf32>
    %211 = vector.shape_cast %210 : vector<1x8x32xf32> to vector<8x32xf32>
    %212 = vector.shape_cast %209 : vector<8x32xf32> to vector<1x8x32xf32>
    tpu.vector_store %arg25[%c0_104, %c0_105, %c0_106], %212 {strides = array<i32>} : memref<1x8x32xf32, #tpu.memory_space<vmem>>, vector<1x8x32xf32>,
    return
  }
  func.func @transform_0(%arg0: i32) -> (i32, i32, i32) {
    %c0_i32 = arith.constant 0 : i32
    %c0_i32_0 = arith.constant 0 : i32
    %c0_i32_1 = arith.constant 0 : i32
    return %arg0, %c0_i32, %c0_i32_0 : i32, i32, i32
  }
  func.func @transform_1(%arg0: i32) -> (i32, i32, i32) {
    %c0_i32 = arith.constant 0 : i32
    %c0_i32_0 = arith.constant 0 : i32
    %c0_i32_1 = arith.constant 0 : i32
    return %arg0, %c0_i32, %c0_i32_0 : i32, i32, i32
  }
  func.func @transform_2(%arg0: i32) -> (i32, i32, i32) {
    %c0_i32 = arith.constant 0 : i32
    %c0_i32_0 = arith.constant 0 : i32
    %c0_i32_1 = arith.constant 0 : i32
    return %arg0, %c0_i32, %c0_i32_0 : i32, i32, i32
  }
  func.func @transform_3(%arg0: i32) -> (i32, i32, i32) {
    %c0_i32 = arith.constant 0 : i32
    %c0_i32_0 = arith.constant 0 : i32
    %c0_i32_1 = arith.constant 0 : i32
    return %arg0, %c0_i32, %c0_i32_0 : i32, i32, i32
  }
  func.func @transform_4(%arg0: i32) -> (i32, i32) {
    %c0_i32 = arith.constant 0 : i32
    %c0_i32_0 = arith.constant 0 : i32
    %c0_i32_1 = arith.constant 0 : i32
    return %c0_i32, %c0_i32_0 : i32, i32
  }
  func.func @transform_5(%arg0: i32) -> (i32, i32) {
    %c0_i32 = arith.constant 0 : i32
    %c0_i32_0 = arith.constant 0 : i32
    %c0_i32_1 = arith.constant 0 : i32
    return %c0_i32, %c0_i32_0 : i32, i32
  }
  func.func @transform_6(%arg0: i32) -> (i32, i32) {
    %c0_i32 = arith.constant 0 : i32
    %c0_i32_0 = arith.constant 0 : i32
    %c0_i32_1 = arith.constant 0 : i32
    return %c0_i32, %c0_i32_0 : i32, i32
  }
  func.func @transform_7(%arg0: i32) -> (i32, i32) {
    %c0_i32 = arith.constant 0 : i32
    %c0_i32_0 = arith.constant 0 : i32
    %c0_i32_1 = arith.constant 0 : i32
    return %c0_i32, %c0_i32_0 : i32, i32
  }
  func.func @transform_8(%arg0: i32) -> (i32, i32) {
    %c0_i32 = arith.constant 0 : i32
    %c0_i32_0 = arith.constant 0 : i32
    %c0_i32_1 = arith.constant 0 : i32
    return %c0_i32, %c0_i32_0 : i32, i32
  }
  func.func @transform_9(%arg0: i32) -> (i32, i32) {
    %c0_i32 = arith.constant 0 : i32
    %c0_i32_0 = arith.constant 0 : i32
    %c0_i32_1 = arith.constant 0 : i32
    return %c0_i32, %c0_i32_0 : i32, i32
  }
  func.func @transform_10(%arg0: i32) -> (i32, i32) {
    %c0_i32 = arith.constant 0 : i32
    %c0_i32_0 = arith.constant 0 : i32
    %c0_i32_1 = arith.constant 0 : i32
    return %c0_i32, %c0_i32_0 : i32, i32
  }
  func.func @transform_11(%arg0: i32) -> (i32, i32) {
    %c0_i32 = arith.constant 0 : i32
    %c0_i32_0 = arith.constant 0 : i32
    %c0_i32_1 = arith.constant 0 : i32
    return %c0_i32, %c0_i32_0 : i32, i32
  }
  func.func @transform_12(%arg0: i32) -> (i32, i32) {
    %c0_i32 = arith.constant 0 : i32
    %c0_i32_0 = arith.constant 0 : i32
    %c0_i32_1 = arith.constant 0 : i32
    return %c0_i32, %c0_i32_0 : i32, i32
  }
  func.func @transform_13(%arg0: i32) -> (i32, i32) {
    %c0_i32 = arith.constant 0 : i32
    %c0_i32_0 = arith.constant 0 : i32
    %c0_i32_1 = arith.constant 0 : i32
    return %c0_i32, %c0_i32_0 : i32, i32
  }
  func.func @transform_14(%arg0: i32) -> (i32, i32) {
    %c0_i32 = arith.constant 0 : i32
    %c0_i32_0 = arith.constant 0 : i32
    %c0_i32_1 = arith.constant 0 : i32
    return %c0_i32, %c0_i32_0 : i32, i32
  }
  func.func @transform_15(%arg0: i32) -> (i32, i32) {
    %c0_i32 = arith.constant 0 : i32
    %c0_i32_0 = arith.constant 0 : i32
    %c0_i32_1 = arith.constant 0 : i32
    return %c0_i32, %c0_i32_0 : i32, i32
  }
  func.func @transform_16(%arg0: i32) -> (i32, i32) {
    %c0_i32 = arith.constant 0 : i32
    %c0_i32_0 = arith.constant 0 : i32
    %c0_i32_1 = arith.constant 0 : i32
    return %c0_i32, %c0_i32_0 : i32, i32
  }
  func.func @transform_17(%arg0: i32) -> (i32, i32) {
    %c0_i32 = arith.constant 0 : i32
    %c0_i32_0 = arith.constant 0 : i32
    %c0_i32_1 = arith.constant 0 : i32
    return %c0_i32, %c0_i32_0 : i32, i32
  }
  func.func @transform_18(%arg0: i32) -> (i32, i32) {
    %c0_i32 = arith.constant 0 : i32
    %c0_i32_0 = arith.constant 0 : i32
    %c0_i32_1 = arith.constant 0 : i32
    return %c0_i32, %c0_i32_0 : i32, i32
  }
  func.func @transform_19(%arg0: i32) -> (i32, i32) {
    %c0_i32 = arith.constant 0 : i32
    %c0_i32_0 = arith.constant 0 : i32
    %c0_i32_1 = arith.constant 0 : i32
    return %c0_i32, %c0_i32_0 : i32, i32
  }
  func.func @transform_20(%arg0: i32) -> (i32, i32) {
    %c0_i32 = arith.constant 0 : i32
    %c0_i32_0 = arith.constant 0 : i32
    %c0_i32_1 = arith.constant 0 : i32
    return %c0_i32, %c0_i32_0 : i32, i32
  }
  func.func @transform_21(%arg0: i32) -> (i32, i32) {
    %c0_i32 = arith.constant 0 : i32
    %c0_i32_0 = arith.constant 0 : i32
    %c0_i32_1 = arith.constant 0 : i32
    return %c0_i32, %c0_i32_0 : i32, i32
  }
  func.func @transform_22(%arg0: i32) -> (i32, i32) {
    %c0_i32 = arith.constant 0 : i32
    %c0_i32_0 = arith.constant 0 : i32
    %c0_i32_1 = arith.constant 0 : i32
    return %c0_i32, %c0_i32_0 : i32, i32
  }
  func.func @transform_23(%arg0: i32) -> (i32, i32) {
    %c0_i32 = arith.constant 0 : i32
    %c0_i32_0 = arith.constant 0 : i32
    %c0_i32_1 = arith.constant 0 : i32
    return %c0_i32, %c0_i32_0 : i32, i32
  }
  func.func @transform_24(%arg0: i32) -> (i32, i32, i32) {
    %c0_i32 = arith.constant 0 : i32
    %c0_i32_0 = arith.constant 0 : i32
    %c0_i32_1 = arith.constant 0 : i32
    return %arg0, %c0_i32, %c0_i32_0 : i32, i32, i32
  }
}

</mosaic_0001>

<llo_original>
// kernel: transformer_decoder_forward.3
$region0: #{transformer_decoder_forward.3}
  #allocation0 [shape = 'u32[]', space=smem, size = 0x4, offset = 0x4, fixed_abs, tag = 'smem constant byte address 0x4 - core index']
  #allocation1 [shape = 'u32[144,128]{1,0:T(1,128)}', space=vmem, size = 0x12000, scoped, tag = 'internal scratch']
  %s0 = inlined_call_operand.vmem [shape: f32[2,8,32], index: 0, kind: input, shape index: {}]
  %s1 = inlined_call_operand.vmem [shape: f32[1,8,32], index: 1, kind: input, shape index: {}]
  %s2 = inlined_call_operand.vmem [shape: f32[2,8,32], index: 2, kind: output, shape index: {}]
  %s3 = sld [smem:[#allocation0]]
  $region18: #{transformer_decoder_forward.3} parent=0
    _
  %s5 = ssub.s32 1, %s3
  %s6 = scalar_select 0, %s5, %s3
  // Predicated region
  $region2: #{transformer_decoder_forward.3} parent=0 // pred_check
    _
  $region3: #{transformer_decoder_forward.3} parent=0 // pred_check_branch
    %8 = sbr.rel (0) target = $region5
  $region4: #{transformer_decoder_forward.3} parent=0 // pred_region
    _
  $region5: #{transformer_decoder_forward.3} parent=0 // pred_fallthru
    _
  // Predicated region
  $region6: #{transformer_decoder_forward.3} parent=0 // pred_check
    _
  $region7: #{transformer_decoder_forward.3} parent=0 // pred_check_branch
    %10 = sbr.rel (0) target = $region9
  $region8: #{transformer_decoder_forward.3} parent=0 // pred_region
    _
  $region9: #{transformer_decoder_forward.3} parent=0 // pred_fallthru
    _
  %v11 = vld [vmem:[%s0] sm:$0xff]
  %v12 = vld [vmem:[%s0 + $0x8] sm:$0xff]
  %v13 = vmul.f32 %v11, 5.656854
  %v14 = vmul.f32 %v12, 5.656854
  %v15 = vld [vmem:[%s1] sm:$0xff]
  %v16 = vadd.f32 %v13, %v15
  %v17 = vadd.f32 %v14, %v15
  %vm18 = vcmask 261120
  %19 = vst.msk [vmem:[%s2] sm:$0xff] %vm18, %v16
  %20 = vst.msk [vmem:[%s2 + $0x8] sm:$0xff] %vm18, %v17
  // Predicated region
  $region10: #{transformer_decoder_forward.3} parent=0 // pred_check
    _
  $region11: #{transformer_decoder_forward.3} parent=0 // pred_check_branch
    %22 = sbr.rel (0) target = $region13
  $region12: #{transformer_decoder_forward.3} parent=0 // pred_region
    _
  $region13: #{transformer_decoder_forward.3} parent=0 // pred_fallthru
    _
  // Predicated region
  $region14: #{transformer_decoder_forward.3} parent=0 // pred_check
    _
  $region15: #{transformer_decoder_forward.3} parent=0 // pred_check_branch
    %24 = sbr.rel (0) target = $region17
  $region16: #{transformer_decoder_forward.3} parent=0 // pred_region
    _
  $region17: #{transformer_decoder_forward.3} parent=0 // pred_fallthru
    _

// kernel: transformer_decoder_forward.4
$region0: #{transformer_decoder_forward.4}
  #allocation0 [shape = 'u32[]', space=smem, size = 0x4, offset = 0x4, fixed_abs, tag = 'smem constant byte address 0x4 - core index']
  #allocation1 [shape = 'u32[144,128]{1,0:T(1,128)}', space=vmem, size = 0x12000, scoped, tag = 'internal scratch']
  #allocation2 [shape = 'f32[8,32]{1,0:T(8,128)}', space=vmem, size = 0x1000, scoped, tag = 'scratch operand']
  %s0 = inlined_call_operand.vmem [shape: f32[2,8,32], index: 0, kind: input, shape index: {}]
  %s1 = inlined_call_operand.vmem [shape: f32[2,8,32], index: 1, kind: input, shape index: {}]
  %s2 = inlined_call_operand.vmem [shape: f32[2,8,8], index: 2, kind: input, shape index: {}]
  %s3 = inlined_call_operand.vmem [shape: f32[2,1,8], index: 3, kind: input, shape index: {}]
  %s4 = inlined_call_operand.vmem [shape: f32[32,96], index: 4, kind: input, shape index: {}]
  %s5 = inlined_call_operand.vmem [shape: f32[1,96], index: 5, kind: input, shape index: {}]
  %s6 = inlined_call_operand.vmem [shape: f32[32,32], index: 6, kind: input, shape index: {}]
  %s7 = inlined_call_operand.vmem [shape: f32[1,32], index: 7, kind: input, shape index: {}]
  %s8 = inlined_call_operand.vmem [shape: f32[32,32], index: 8, kind: input, shape index: {}]
  %s9 = inlined_call_operand.vmem [shape: f32[1,32], index: 9, kind: input, shape index: {}]
  %s10 = inlined_call_operand.vmem [shape: f32[32,64], index: 10, kind: input, shape index: {}]
  %s11 = inlined_call_operand.vmem [shape: f32[1,64], index: 11, kind: input, shape index: {}]
  %s12 = inlined_call_operand.vmem [shape: f32[32,32], index: 12, kind: input, shape index: {}]
  %s13 = inlined_call_operand.vmem [shape: f32[1,32], index: 13, kind: input, shape index: {}]
  %s14 = inlined_call_operand.vmem [shape: f32[32,64], index: 14, kind: input, shape index: {}]
  %s15 = inlined_call_operand.vmem [shape: f32[1,64], index: 15, kind: input, shape index: {}]
  %s16 = inlined_call_operand.vmem [shape: f32[64,32], index: 16, kind: input, shape index: {}]
  %s17 = inlined_call_operand.vmem [shape: f32[1,32], index: 17, kind: input, shape index: {}]
  %s18 = inlined_call_operand.vmem [shape: f32[1,32], index: 18, kind: input, shape index: {}]
  %s19 = inlined_call_operand.vmem [shape: f32[1,32], index: 19, kind: input, shape index: {}]
  %s20 = inlined_call_operand.vmem [shape: f32[1,32], index: 20, kind: input, shape index: {}]
  %s21 = inlined_call_operand.vmem [shape: f32[1,32], index: 21, kind: input, shape index: {}]
  %s22 = inlined_call_operand.vmem [shape: f32[1,32], index: 22, kind: input, shape index: {}]
  %s23 = inlined_call_operand.vmem [shape: f32[1,32], index: 23, kind: input, shape index: {}]
  %s24 = inlined_call_operand.vmem [shape: f32[2,8,32], index: 24, kind: output, shape index: {}]
  %s25 = sld [smem:[#allocation0]]
  $region129: #{transformer_decoder_forward.4} parent=0
    _
  %s27 = ssub.s32 1, %s25
  %s28 = scalar_select 0, %s27, %s25
  loop: start=0, step=1, limit=4
  $region2: #{transformer_decoder_forward.4} parent=0 // loop_pre_header
    _
  $region3: #{transformer_decoder_forward.4} parent=0 // loop_header
    %s30 = sphi 0, %s34
    %p31 = scmp.ge.s32.totalorder %s30, 4
    %s40 = sphi 0, %s42
    %s43 = sphi 0, %s40
    %s44 = sphi 0, %s43
    %s60 = sphi 0, %s44
    %s66 = sphi 0, %s68
    %s69 = sphi 0, %s66
    %s70 = sphi 0, %s69
    %s86 = sphi 0, %s70
    %s92 = sphi 0, %s94
    %s95 = sphi 0, %s92
    %s96 = sphi 0, %s95
    %s112 = sphi 0, %s96
    %s118 = sphi 0, %s120
    %s121 = sphi 0, %s118
    %s122 = sphi 0, %s121
    %s138 = sphi 0, %s122
    %s142 = sphi 0, %s142
    %s144 = sphi 0, %s142
    %s145 = sphi 0, %s144
    %s159 = sphi 0, %s145
    %s163 = sphi 0, %s163
    %s165 = sphi 0, %s163
    %s166 = sphi 0, %s165
    %s180 = sphi 0, %s166
    %s184 = sphi 0, %s184
    %s186 = sphi 0, %s184
    %s187 = sphi 0, %s186
    %s201 = sphi 0, %s187
    %s205 = sphi 0, %s205
    %s207 = sphi 0, %s205
    %s208 = sphi 0, %s207
    %s222 = sphi 0, %s208
    %s226 = sphi 0, %s226
    %s228 = sphi 0, %s226
    %s229 = sphi 0, %s228
    %s243 = sphi 0, %s229
    %s247 = sphi 0, %s247
    %s249 = sphi 0, %s247
    %s250 = sphi 0, %s249
    %s264 = sphi 0, %s250
    %s268 = sphi 0, %s268
    %s270 = sphi 0, %s268
    %s271 = sphi 0, %s270
    %s285 = sphi 0, %s271
    %s289 = sphi 0, %s289
    %s291 = sphi 0, %s289
    %s292 = sphi 0, %s291
    %s306 = sphi 0, %s292
    %s310 = sphi 0, %s310
    %s312 = sphi 0, %s310
    %s313 = sphi 0, %s312
    %s327 = sphi 0, %s313
    %s331 = sphi 0, %s331
    %s333 = sphi 0, %s331
    %s334 = sphi 0, %s333
    %s348 = sphi 0, %s334
    %s352 = sphi 0, %s352
    %s354 = sphi 0, %s352
    %s355 = sphi 0, %s354
    %s369 = sphi 0, %s355
    %s373 = sphi 0, %s373
    %s375 = sphi 0, %s373
    %s376 = sphi 0, %s375
    %s390 = sphi 0, %s376
    %s394 = sphi 0, %s394
    %s396 = sphi 0, %s394
    %s397 = sphi 0, %s396
    %s411 = sphi 0, %s397
    %s415 = sphi 0, %s415
    %s417 = sphi 0, %s415
    %s418 = sphi 0, %s417
    %s432 = sphi 0, %s418
    %s436 = sphi 0, %s436
    %s438 = sphi 0, %s436
    %s439 = sphi 0, %s438
    %s453 = sphi 0, %s439
    %s457 = sphi 0, %s457
    %s459 = sphi 0, %s457
    %s460 = sphi 0, %s459
    %s474 = sphi 0, %s460
    %s478 = sphi 0, %s478
    %s480 = sphi 0, %s478
    %s481 = sphi 0, %s480
    %s495 = sphi 0, %s481
    %s499 = sphi 0, %s499
    %s501 = sphi 0, %s499
    %s502 = sphi 0, %s501
    %s516 = sphi 0, %s502
    %s520 = sphi 0, %s520
    %s522 = sphi 0, %s520
    %s523 = sphi 0, %s522
    %s537 = sphi 0, %s523
    %s541 = sphi 0, %s541
    %s543 = sphi 0, %s541
    %s544 = sphi 0, %s543
    %s558 = sphi 0, %s544
    %s564 = sphi 0, %s566
    %s567 = sphi 0, %s564
    %s568 = sphi 0, %s567
    %s584 = sphi 0, %s568
  $region4: #{transformer_decoder_forward.4} parent=0 // loop_header_branch
    %33 = sbr.rel (%p31) target = $region8
  $region5: #{transformer_decoder_forward.4} parent=0 // loop_body
    %s35 = ssub.s32 %s30, 1
    %s36 = ssub.s32 %s30, 2
    %s37 = sadd.s32 %s30, 1
    %s38 = ssub.s32 %s30, %s37
    %p39 = scmp.eq.s32.totalorder %s38, 0
    %s41 = sadd.s32 %s40, 1
    %s42 = scalar_select %p39, %s40, %s41
    %p45 = pneg %p39
    %p46 = scmp.eq.s32.totalorder %s30, 1
    %p47 = por %p45, %p46
    %p48 = scmp.ne.s32.totalorder %s40, %s43
    %p49 = scmp.eq.s32.totalorder %s30, 0
    %p50 = por %p48, %p49
    %p51 = scmp.ne.s32.totalorder %s40, %s43
    %p52 = scmp.eq.s32.totalorder %s35, 1
    %p53 = por %p51, %p52
    %p54 = scmp.ne.s32.totalorder %s43, %s44
    %p55 = scmp.eq.s32.totalorder %s35, 0
    %p56 = por %p54, %p55
    %p57 = scmp.ne.s32.totalorder %s43, %s44
    %p58 = scmp.eq.s32.totalorder %s36, 1
    %p59 = por %p57, %p58
    %p61 = scmp.ne.s32.totalorder %s44, %s60
    %p62 = scmp.eq.s32.totalorder %s36, 0
    %p63 = por %p61, %p62
    %s64 = ssub.s32 %s30, %s37
    %p65 = scmp.eq.s32.totalorder %s64, 0
    %s67 = sadd.s32 %s66, 1
    %s68 = scalar_select %p65, %s66, %s67
    %p71 = pneg %p65
    %p72 = scmp.eq.s32.totalorder %s30, 1
    %p73 = por %p71, %p72
    %p74 = scmp.ne.s32.totalorder %s66, %s69
    %p75 = scmp.eq.s32.totalorder %s30, 0
    %p76 = por %p74, %p75
    %p77 = scmp.ne.s32.totalorder %s66, %s69
    %p78 = scmp.eq.s32.totalorder %s35, 1
    %p79 = por %p77, %p78
    %p80 = scmp.ne.s32.totalorder %s69, %s70
    %p81 = scmp.eq.s32.totalorder %s35, 0
    %p82 = por %p80, %p81
    %p83 = scmp.ne.s32.totalorder %s69, %s70
    %p84 = scmp.eq.s32.totalorder %s36, 1
    %p85 = por %p83, %p84
    %p87 = scmp.ne.s32.totalorder %s70, %s86
    %p88 = scmp.eq.s32.totalorder %s36, 0
    %p89 = por %p87, %p88
    %s90 = ssub.s32 %s30, %s37
    %p91 = scmp.eq.s32.totalorder %s90, 0
    %s93 = sadd.s32 %s92, 1
    %s94 = scalar_select %p91, %s92, %s93
    %p97 = pneg %p91
    %p98 = scmp.eq.s32.totalorder %s30, 1
    %p99 = por %p97, %p98
    %p100 = scmp.ne.s32.totalorder %s92, %s95
    %p101 = scmp.eq.s32.totalorder %s30, 0
    %p102 = por %p100, %p101
    %p103 = scmp.ne.s32.totalorder %s92, %s95
    %p104 = scmp.eq.s32.totalorder %s35, 1
    %p105 = por %p103, %p104
    %p106 = scmp.ne.s32.totalorder %s95, %s96
    %p107 = scmp.eq.s32.totalorder %s35, 0
    %p108 = por %p106, %p107
    %p109 = scmp.ne.s32.totalorder %s95, %s96
    %p110 = scmp.eq.s32.totalorder %s36, 1
    %p111 = por %p109, %p110
    %p113 = scmp.ne.s32.totalorder %s96, %s112
    %p114 = scmp.eq.s32.totalorder %s36, 0
    %p115 = por %p113, %p114
    %s116 = ssub.s32 %s30, %s37
    %p117 = scmp.eq.s32.totalorder %s116, 0
    %s119 = sadd.s32 %s118, 1
    %s120 = scalar_select %p117, %s118, %s119
    %p123 = pneg %p117
    %p124 = scmp.eq.s32.totalorder %s30, 1
    %p125 = por %p123, %p124
    %p126 = scmp.ne.s32.totalorder %s118, %s121
    %p127 = scmp.eq.s32.totalorder %s30, 0
    %p128 = por %p126, %p127
    %p129 = scmp.ne.s32.totalorder %s118, %s121
    %p130 = scmp.eq.s32.totalorder %s35, 1
    %p131 = por %p129, %p130
    %p132 = scmp.ne.s32.totalorder %s121, %s122
    %p133 = scmp.eq.s32.totalorder %s35, 0
    %p134 = por %p132, %p133
    %p135 = scmp.ne.s32.totalorder %s121, %s122
    %p136 = scmp.eq.s32.totalorder %s36, 1
    %p137 = por %p135, %p136
    %p139 = scmp.ne.s32.totalorder %s122, %s138
    %p140 = scmp.eq.s32.totalorder %s36, 0
    %p141 = por %p139, %p140
    %s143 = sadd.s32 %s142, 1
    %p146 = scmp.eq.s32.totalorder %s30, 1
    %p147 = scmp.ne.s32.totalorder %s142, %s144
    %p148 = scmp.eq.s32.totalorder %s30, 0
    %p149 = por %p147, %p148
    %p150 = scmp.ne.s32.totalorder %s142, %s144
    %p151 = scmp.eq.s32.totalorder %s35, 1
    %p152 = por %p150, %p151
    %p153 = scmp.ne.s32.totalorder %s144, %s145
    %p154 = scmp.eq.s32.totalorder %s35, 0
    %p155 = por %p153, %p154
    %p156 = scmp.ne.s32.totalorder %s144, %s145
    %p157 = scmp.eq.s32.totalorder %s36, 1
    %p158 = por %p156, %p157
    %p160 = scmp.ne.s32.totalorder %s145, %s159
    %p161 = scmp.eq.s32.totalorder %s36, 0
    %p162 = por %p160, %p161
    %s164 = sadd.s32 %s163, 1
    %p167 = scmp.eq.s32.totalorder %s30, 1
    %p168 = scmp.ne.s32.totalorder %s163, %s165
    %p169 = scmp.eq.s32.totalorder %s30, 0
    %p170 = por %p168, %p169
    %p171 = scmp.ne.s32.totalorder %s163, %s165
    %p172 = scmp.eq.s32.totalorder %s35, 1
    %p173 = por %p171, %p172
    %p174 = scmp.ne.s32.totalorder %s165, %s166
    %p175 = scmp.eq.s32.totalorder %s35, 0
    %p176 = por %p174, %p175
    %p177 = scmp.ne.s32.totalorder %s165, %s166
    %p178 = scmp.eq.s32.totalorder %s36, 1
    %p179 = por %p177, %p178
    %p181 = scmp.ne.s32.totalorder %s166, %s180
    %p182 = scmp.eq.s32.totalorder %s36, 0
    %p183 = por %p181, %p182
    %s185 = sadd.s32 %s184, 1
    %p188 = scmp.eq.s32.totalorder %s30, 1
    %p189 = scmp.ne.s32.totalorder %s184, %s186
    %p190 = scmp.eq.s32.totalorder %s30, 0
    %p191 = por %p189, %p190
    %p192 = scmp.ne.s32.totalorder %s184, %s186
    %p193 = scmp.eq.s32.totalorder %s35, 1
    %p194 = por %p192, %p193
    %p195 = scmp.ne.s32.totalorder %s186, %s187
    %p196 = scmp.eq.s32.totalorder %s35, 0
    %p197 = por %p195, %p196
    %p198 = scmp.ne.s32.totalorder %s186, %s187
    %p199 = scmp.eq.s32.totalorder %s36, 1
    %p200 = por %p198, %p199
    %p202 = scmp.ne.s32.totalorder %s187, %s201
    %p203 = scmp.eq.s32.totalorder %s36, 0
    %p204 = por %p202, %p203
    %s206 = sadd.s32 %s205, 1
    %p209 = scmp.eq.s32.totalorder %s30, 1
    %p210 = scmp.ne.s32.totalorder %s205, %s207
    %p211 = scmp.eq.s32.totalorder %s30, 0
    %p212 = por %p210, %p211
    %p213 = scmp.ne.s32.totalorder %s205, %s207
    %p214 = scmp.eq.s32.totalorder %s35, 1
    %p215 = por %p213, %p214
    %p216 = scmp.ne.s32.totalorder %s207, %s208
    %p217 = scmp.eq.s32.totalorder %s35, 0
    %p218 = por %p216, %p217
    %p219 = scmp.ne.s32.totalorder %s207, %s208
    %p220 = scmp.eq.s32.totalorder %s36, 1
    %p221 = por %p219, %p220
    %p223 = scmp.ne.s32.totalorder %s208, %s222
    %p224 = scmp.eq.s32.totalorder %s36, 0
    %p225 = por %p223, %p224
    %s227 = sadd.s32 %s226, 1
    %p230 = scmp.eq.s32.totalorder %s30, 1
    %p231 = scmp.ne.s32.totalorder %s226, %s228
    %p232 = scmp.eq.s32.totalorder %s30, 0
    %p233 = por %p231, %p232
    %p234 = scmp.ne.s32.totalorder %s226, %s228
    %p235 = scmp.eq.s32.totalorder %s35, 1
    %p236 = por %p234, %p235
    %p237 = scmp.ne.s32.totalorder %s228, %s229
    %p238 = scmp.eq.s32.totalorder %s35, 0
    %p239 = por %p237, %p238
    %p240 = scmp.ne.s32.totalorder %s228, %s229
    %p241 = scmp.eq.s32.totalorder %s36, 1
    %p242 = por %p240, %p241
    %p244 = scmp.ne.s32.totalorder %s229, %s243
    %p245 = scmp.eq.s32.totalorder %s36, 0
    %p246 = por %p244, %p245
    %s248 = sadd.s32 %s247, 1
    %p251 = scmp.eq.s32.totalorder %s30, 1
    %p252 = scmp.ne.s32.totalorder %s247, %s249
    %p253 = scmp.eq.s32.totalorder %s30, 0
    %p254 = por %p252, %p253
    %p255 = scmp.ne.s32.totalorder %s247, %s249
    %p256 = scmp.eq.s32.totalorder %s35, 1
    %p257 = por %p255, %p256
    %p258 = scmp.ne.s32.totalorder %s249, %s250
    %p259 = scmp.eq.s32.totalorder %s35, 0
    %p260 = por %p258, %p259
    %p261 = scmp.ne.s32.totalorder %s249, %s250
    %p262 = scmp.eq.s32.totalorder %s36, 1
    %p263 = por %p261, %p262
    %p265 = scmp.ne.s32.totalorder %s250, %s264
    %p266 = scmp.eq.s32.totalorder %s36, 0
    %p267 = por %p265, %p266
    %s269 = sadd.s32 %s268, 1
    %p272 = scmp.eq.s32.totalorder %s30, 1
    %p273 = scmp.ne.s32.totalorder %s268, %s270
    %p274 = scmp.eq.s32.totalorder %s30, 0
    %p275 = por %p273, %p274
    %p276 = scmp.ne.s32.totalorder %s268, %s270
    %p277 = scmp.eq.s32.totalorder %s35, 1
    %p278 = por %p276, %p277
    %p279 = scmp.ne.s32.totalorder %s270, %s271
    %p280 = scmp.eq.s32.totalorder %s35, 0
    %p281 = por %p279, %p280
    %p282 = scmp.ne.s32.totalorder %s270, %s271
    %p283 = scmp.eq.s32.totalorder %s36, 1
    %p284 = por %p282, %p283
    %p286 = scmp.ne.s32.totalorder %s271, %s285
    %p287 = scmp.eq.s32.totalorder %s36, 0
    %p288 = por %p286, %p287
    %s290 = sadd.s32 %s289, 1
    %p293 = scmp.eq.s32.totalorder %s30, 1
    %p294 = scmp.ne.s32.totalorder %s289, %s291
    %p295 = scmp.eq.s32.totalorder %s30, 0
    %p296 = por %p294, %p295
    %p297 = scmp.ne.s32.totalorder %s289, %s291
    %p298 = scmp.eq.s32.totalorder %s35, 1
    %p299 = por %p297, %p298
    %p300 = scmp.ne.s32.totalorder %s291, %s292
    %p301 = scmp.eq.s32.totalorder %s35, 0
    %p302 = por %p300, %p301
    %p303 = scmp.ne.s32.totalorder %s291, %s292
    %p304 = scmp.eq.s32.totalorder %s36, 1
    %p305 = por %p303, %p304
    %p307 = scmp.ne.s32.totalorder %s292, %s306
    %p308 = scmp.eq.s32.totalorder %s36, 0
    %p309 = por %p307, %p308
    %s311 = sadd.s32 %s310, 1
    %p314 = scmp.eq.s32.totalorder %s30, 1
    %p315 = scmp.ne.s32.totalorder %s310, %s312
    %p316 = scmp.eq.s32.totalorder %s30, 0
    %p317 = por %p315, %p316
    %p318 = scmp.ne.s32.totalorder %s310, %s312
    %p319 = scmp.eq.s32.totalorder %s35, 1
    %p320 = por %p318, %p319
    %p321 = scmp.ne.s32.totalorder %s312, %s313
    %p322 = scmp.eq.s32.totalorder %s35, 0
    %p323 = por %p321, %p322
    %p324 = scmp.ne.s32.totalorder %s312, %s313
    %p325 = scmp.eq.s32.totalorder %s36, 1
    %p326 = por %p324, %p325
    %p328 = scmp.ne.s32.totalorder %s313, %s327
    %p329 = scmp.eq.s32.totalorder %s36, 0
    %p330 = por %p328, %p329
    %s332 = sadd.s32 %s331, 1
    %p335 = scmp.eq.s32.totalorder %s30, 1
    %p336 = scmp.ne.s32.totalorder %s331, %s333
    %p337 = scmp.eq.s32.totalorder %s30, 0
    %p338 = por %p336, %p337
    %p339 = scmp.ne.s32.totalorder %s331, %s333
    %p340 = scmp.eq.s32.totalorder %s35, 1
    %p341 = por %p339, %p340
    %p342 = scmp.ne.s32.totalorder %s333, %s334
    %p343 = scmp.eq.s32.totalorder %s35, 0
    %p344 = por %p342, %p343
    %p345 = scmp.ne.s32.totalorder %s333, %s334
    %p346 = scmp.eq.s32.totalorder %s36, 1
    %p347 = por %p345, %p346
    %p349 = scmp.ne.s32.totalorder %s334, %s348
    %p350 = scmp.eq.s32.totalorder %s36, 0
    %p351 = por %p349, %p350
    %s353 = sadd.s32 %s352, 1
    %p356 = scmp.eq.s32.totalorder %s30, 1
    %p357 = scmp.ne.s32.totalorder %s352, %s354
    %p358 = scmp.eq.s32.totalorder %s30, 0
    %p359 = por %p357, %p358
    %p360 = scmp.ne.s32.totalorder %s352, %s354
    %p361 = scmp.eq.s32.totalorder %s35, 1
    %p362 = por %p360, %p361
    %p363 = scmp.ne.s32.totalorder %s354, %s355
    %p364 = scmp.eq.s32.totalorder %s35, 0
    %p365 = por %p363, %p364
    %p366 = scmp.ne.s32.totalorder %s354, %s355
    %p367 = scmp.eq.s32.totalorder %s36, 1
    %p368 = por %p366, %p367
    %p370 = scmp.ne.s32.totalorder %s355, %s369
    %p371 = scmp.eq.s32.totalorder %s36, 0
    %p372 = por %p370, %p371
    %s374 = sadd.s32 %s373, 1
    %p377 = scmp.eq.s32.totalorder %s30, 1
    %p378 = scmp.ne.s32.totalorder %s373, %s375
    %p379 = scmp.eq.s32.totalorder %s30, 0
    %p380 = por %p378, %p379
    %p381 = scmp.ne.s32.totalorder %s373, %s375
    %p382 = scmp.eq.s32.totalorder %s35, 1
    %p383 = por %p381, %p382
    %p384 = scmp.ne.s32.totalorder %s375, %s376
    %p385 = scmp.eq.s32.totalorder %s35, 0
    %p386 = por %p384, %p385
    %p387 = scmp.ne.s32.totalorder %s375, %s376
    %p388 = scmp.eq.s32.totalorder %s36, 1
    %p389 = por %p387, %p388
    %p391 = scmp.ne.s32.totalorder %s376, %s390
    %p392 = scmp.eq.s32.totalorder %s36, 0
    %p393 = por %p391, %p392
    %s395 = sadd.s32 %s394, 1
    %p398 = scmp.eq.s32.totalorder %s30, 1
    %p399 = scmp.ne.s32.totalorder %s394, %s396
    %p400 = scmp.eq.s32.totalorder %s30, 0
    %p401 = por %p399, %p400
    %p402 = scmp.ne.s32.totalorder %s394, %s396
    %p403 = scmp.eq.s32.totalorder %s35, 1
    %p404 = por %p402, %p403
    %p405 = scmp.ne.s32.totalorder %s396, %s397
    %p406 = scmp.eq.s32.totalorder %s35, 0
    %p407 = por %p405, %p406
    %p408 = scmp.ne.s32.totalorder %s396, %s397
    %p409 = scmp.eq.s32.totalorder %s36, 1
    %p410 = por %p408, %p409
    %p412 = scmp.ne.s32.totalorder %s397, %s411
    %p413 = scmp.eq.s32.totalorder %s36, 0
    %p414 = por %p412, %p413
    %s416 = sadd.s32 %s415, 1
    %p419 = scmp.eq.s32.totalorder %s30, 1
    %p420 = scmp.ne.s32.totalorder %s415, %s417
    %p421 = scmp.eq.s32.totalorder %s30, 0
    %p422 = por %p420, %p421
    %p423 = scmp.ne.s32.totalorder %s415, %s417
    %p424 = scmp.eq.s32.totalorder %s35, 1
    %p425 = por %p423, %p424
    %p426 = scmp.ne.s32.totalorder %s417, %s418
    %p427 = scmp.eq.s32.totalorder %s35, 0
    %p428 = por %p426, %p427
    %p429 = scmp.ne.s32.totalorder %s417, %s418
    %p430 = scmp.eq.s32.totalorder %s36, 1
    %p431 = por %p429, %p430
    %p433 = scmp.ne.s32.totalorder %s418, %s432
    %p434 = scmp.eq.s32.totalorder %s36, 0
    %p435 = por %p433, %p434
    %s437 = sadd.s32 %s436, 1
    %p440 = scmp.eq.s32.totalorder %s30, 1
    %p441 = scmp.ne.s32.totalorder %s436, %s438
    %p442 = scmp.eq.s32.totalorder %s30, 0
    %p443 = por %p441, %p442
    %p444 = scmp.ne.s32.totalorder %s436, %s438
    %p445 = scmp.eq.s32.totalorder %s35, 1
    %p446 = por %p444, %p445
    %p447 = scmp.ne.s32.totalorder %s438, %s439
    %p448 = scmp.eq.s32.totalorder %s35, 0
    %p449 = por %p447, %p448
    %p450 = scmp.ne.s32.totalorder %s438, %s439
    %p451 = scmp.eq.s32.totalorder %s36, 1
    %p452 = por %p450, %p451
    %p454 = scmp.ne.s32.totalorder %s439, %s453
    %p455 = scmp.eq.s32.totalorder %s36, 0
    %p456 = por %p454, %p455
    %s458 = sadd.s32 %s457, 1
    %p461 = scmp.eq.s32.totalorder %s30, 1
    %p462 = scmp.ne.s32.totalorder %s457, %s459
    %p463 = scmp.eq.s32.totalorder %s30, 0
    %p464 = por %p462, %p463
    %p465 = scmp.ne.s32.totalorder %s457, %s459
    %p466 = scmp.eq.s32.totalorder %s35, 1
    %p467 = por %p465, %p466
    %p468 = scmp.ne.s32.totalorder %s459, %s460
    %p469 = scmp.eq.s32.totalorder %s35, 0
    %p470 = por %p468, %p469
    %p471 = scmp.ne.s32.totalorder %s459, %s460
    %p472 = scmp.eq.s32.totalorder %s36, 1
    %p473 = por %p471, %p472
    %p475 = scmp.ne.s32.totalorder %s460, %s474
    %p476 = scmp.eq.s32.totalorder %s36, 0
    %p477 = por %p475, %p476
    %s479 = sadd.s32 %s478, 1
    %p482 = scmp.eq.s32.totalorder %s30, 1
    %p483 = scmp.ne.s32.totalorder %s478, %s480
    %p484 = scmp.eq.s32.totalorder %s30, 0
    %p485 = por %p483, %p484
    %p486 = scmp.ne.s32.totalorder %s478, %s480
    %p487 = scmp.eq.s32.totalorder %s35, 1
    %p488 = por %p486, %p487
    %p489 = scmp.ne.s32.totalorder %s480, %s481
    %p490 = scmp.eq.s32.totalorder %s35, 0
    %p491 = por %p489, %p490
    %p492 = scmp.ne.s32.totalorder %s480, %s481
    %p493 = scmp.eq.s32.totalorder %s36, 1
    %p494 = por %p492, %p493
    %p496 = scmp.ne.s32.totalorder %s481, %s495
    %p497 = scmp.eq.s32.totalorder %s36, 0
    %p498 = por %p496, %p497
    %s500 = sadd.s32 %s499, 1
    %p503 = scmp.eq.s32.totalorder %s30, 1
    %p504 = scmp.ne.s32.totalorder %s499, %s501
    %p505 = scmp.eq.s32.totalorder %s30, 0
    %p506 = por %p504, %p505
    %p507 = scmp.ne.s32.totalorder %s499, %s501
    %p508 = scmp.eq.s32.totalorder %s35, 1
    %p509 = por %p507, %p508
    %p510 = scmp.ne.s32.totalorder %s501, %s502
    %p511 = scmp.eq.s32.totalorder %s35, 0
    %p512 = por %p510, %p511
    %p513 = scmp.ne.s32.totalorder %s501, %s502
    %p514 = scmp.eq.s32.totalorder %s36, 1
    %p515 = por %p513, %p514
    %p517 = scmp.ne.s32.totalorder %s502, %s516
    %p518 = scmp.eq.s32.totalorder %s36, 0
    %p519 = por %p517, %p518
    %s521 = sadd.s32 %s520, 1
    %p524 = scmp.eq.s32.totalorder %s30, 1
    %p525 = scmp.ne.s32.totalorder %s520, %s522
    %p526 = scmp.eq.s32.totalorder %s30, 0
    %p527 = por %p525, %p526
    %p528 = scmp.ne.s32.totalorder %s520, %s522
    %p529 = scmp.eq.s32.totalorder %s35, 1
    %p530 = por %p528, %p529
    %p531 = scmp.ne.s32.totalorder %s522, %s523
    %p532 = scmp.eq.s32.totalorder %s35, 0
    %p533 = por %p531, %p532
    %p534 = scmp.ne.s32.totalorder %s522, %s523
    %p535 = scmp.eq.s32.totalorder %s36, 1
    %p536 = por %p534, %p535
    %p538 = scmp.ne.s32.totalorder %s523, %s537
    %p539 = scmp.eq.s32.totalorder %s36, 0
    %p540 = por %p538, %p539
    %s542 = sadd.s32 %s541, 1
    %p545 = scmp.eq.s32.totalorder %s30, 1
    %p546 = scmp.ne.s32.totalorder %s541, %s543
    %p547 = scmp.eq.s32.totalorder %s30, 0
    %p548 = por %p546, %p547
    %p549 = scmp.ne.s32.totalorder %s541, %s543
    %p550 = scmp.eq.s32.totalorder %s35, 1
    %p551 = por %p549, %p550
    %p552 = scmp.ne.s32.totalorder %s543, %s544
    %p553 = scmp.eq.s32.totalorder %s35, 0
    %p554 = por %p552, %p553
    %p555 = scmp.ne.s32.totalorder %s543, %s544
    %p556 = scmp.eq.s32.totalorder %s36, 1
    %p557 = por %p555, %p556
    %p559 = scmp.ne.s32.totalorder %s544, %s558
    %p560 = scmp.eq.s32.totalorder %s36, 0
    %p561 = por %p559, %p560
    %s562 = ssub.s32 %s30, %s37
    %p563 = scmp.eq.s32.totalorder %s562, 0
    %s565 = sadd.s32 %s564, 1
    %s566 = scalar_select %p563, %s564, %s565
    %p569 = pneg %p563
    %p570 = scmp.eq.s32.totalorder %s30, 1
    %p571 = por %p569, %p570
    %p572 = scmp.ne.s32.totalorder %s564, %s567
    %p573 = scmp.eq.s32.totalorder %s30, 0
    %p574 = por %p572, %p573
    %p575 = scmp.ne.s32.totalorder %s564, %s567
    %p576 = scmp.eq.s32.totalorder %s35, 1
    %p577 = por %p575, %p576
    %p578 = scmp.ne.s32.totalorder %s567, %s568
    %p579 = scmp.eq.s32.totalorder %s35, 0
    %p580 = por %p578, %p579
    %p581 = scmp.ne.s32.totalorder %s567, %s568
    %p582 = scmp.eq.s32.totalorder %s36, 1
    %p583 = por %p581, %p582
    %p585 = scmp.ne.s32.totalorder %s568, %s584
    %p586 = scmp.eq.s32.totalorder %s36, 0
    %p587 = por %p585, %p586
    %p588 = scmp.le.s32.totalorder 1, %s30
    %p589 = scmp.lt.s32.totalorder %s30, 3
    %p590 = pnand %p588, %p589
    %p591 = pneg %p590
    // Predicated region
    $region9: #{transformer_decoder_forward.4} parent=5 // pred_check
      _
    $region10: #{transformer_decoder_forward.4} parent=5 // pred_check_branch
      %593 = sbr.rel (%p590) target = $region12
    $region11: #{transformer_decoder_forward.4} parent=5 // pred_region
      %s594 = ssub.s32 %s30, 1
      // Predicated region
      $region13: #{transformer_decoder_forward.4} parent=11 // pred_check
        %p595 = pneg %p155
      $region14: #{transformer_decoder_forward.4} parent=11 // pred_check_branch
        %597 = sbr.rel (%p595) target = $region16
      $region15: #{transformer_decoder_forward.4} parent=11 // pred_region
        _
      $region16: #{transformer_decoder_forward.4} parent=11 // pred_fallthru
        _
      // Predicated region
      $region17: #{transformer_decoder_forward.4} parent=11 // pred_check
        %p598 = pneg %p176
      $region18: #{transformer_decoder_forward.4} parent=11 // pred_check_branch
        %600 = sbr.rel (%p598) target = $region20
      $region19: #{transformer_decoder_forward.4} parent=11 // pred_region
        _
      $region20: #{transformer_decoder_forward.4} parent=11 // pred_fallthru
        _
      // Predicated region
      $region21: #{transformer_decoder_forward.4} parent=11 // pred_check
        %p601 = pneg %p197
      $region22: #{transformer_decoder_forward.4} parent=11 // pred_check_branch
        %603 = sbr.rel (%p601) target = $region24
      $region23: #{transformer_decoder_forward.4} parent=11 // pred_region
        _
      $region24: #{transformer_decoder_forward.4} parent=11 // pred_fallthru
        _
      // Predicated region
      $region25: #{transformer_decoder_forward.4} parent=11 // pred_check
        %p604 = pneg %p218
      $region26: #{transformer_decoder_forward.4} parent=11 // pred_check_branch
        %606 = sbr.rel (%p604) target = $region28
      $region27: #{transformer_decoder_forward.4} parent=11 // pred_region
        _
      $region28: #{transformer_decoder_forward.4} parent=11 // pred_fallthru
        _
      // Predicated region
      $region29: #{transformer_decoder_forward.4} parent=11 // pred_check
        %p607 = pneg %p239
      $region30: #{transformer_decoder_forward.4} parent=11 // pred_check_branch
        %609 = sbr.rel (%p607) target = $region32
      $region31: #{transformer_decoder_forward.4} parent=11 // pred_region
        _
      $region32: #{transformer_decoder_forward.4} parent=11 // pred_fallthru
        _
      // Predicated region
      $region33: #{transformer_decoder_forward.4} parent=11 // pred_check
        %p610 = pneg %p260
      $region34: #{transformer_decoder_forward.4} parent=11 // pred_check_branch
        %612 = sbr.rel (%p610) target = $region36
      $region35: #{transformer_decoder_forward.4} parent=11 // pred_region
        _
      $region36: #{transformer_decoder_forward.4} parent=11 // pred_fallthru
        _
      // Predicated region
      $region37: #{transformer_decoder_forward.4} parent=11 // pred_check
        %p613 = pneg %p281
      $region38: #{transformer_decoder_forward.4} parent=11 // pred_check_branch
        %615 = sbr.rel (%p613) target = $region40
      $region39: #{transformer_decoder_forward.4} parent=11 // pred_region
        _
      $region40: #{transformer_decoder_forward.4} parent=11 // pred_fallthru
        _
      // Predicated region
      $region41: #{transformer_decoder_forward.4} parent=11 // pred_check
        %p616 = pneg %p302
      $region42: #{transformer_decoder_forward.4} parent=11 // pred_check_branch
        %618 = sbr.rel (%p616) target = $region44
      $region43: #{transformer_decoder_forward.4} parent=11 // pred_region
        _
      $region44: #{transformer_decoder_forward.4} parent=11 // pred_fallthru
        _
      // Predicated region
      $region45: #{transformer_decoder_forward.4} parent=11 // pred_check
        %p619 = pneg %p323
      $region46: #{transformer_decoder_forward.4} parent=11 // pred_check_branch
        %621 = sbr.rel (%p619) target = $region48
      $region47: #{transformer_decoder_forward.4} parent=11 // pred_region
        _
      $region48: #{transformer_decoder_forward.4} parent=11 // pred_fallthru
        _
      // Predicated region
      $region49: #{transformer_decoder_forward.4} parent=11 // pred_check
        %p622 = pneg %p344
      $region50: #{transformer_decoder_forward.4} parent=11 // pred_check_branch
        %624 = sbr.rel (%p622) target = $region52
      $region51: #{transformer_decoder_forward.4} parent=11 // pred_region
        _
      $region52: #{transformer_decoder_forward.4} parent=11 // pred_fallthru
        _
      // Predicated region
      $region53: #{transformer_decoder_forward.4} parent=11 // pred_check
        %p625 = pneg %p365
      $region54: #{transformer_decoder_forward.4} parent=11 // pred_check_branch
        %627 = sbr.rel (%p625) target = $region56
      $region55: #{transformer_decoder_forward.4} parent=11 // pred_region
        _
      $region56: #{transformer_decoder_forward.4} parent=11 // pred_fallthru
        _
      // Predicated region
      $region57: #{transformer_decoder_forward.4} parent=11 // pred_check
        %p628 = pneg %p386
      $region58: #{transformer_decoder_forward.4} parent=11 // pred_check_branch
        %630 = sbr.rel (%p628) target = $region60
      $region59: #{transformer_decoder_forward.4} parent=11 // pred_region
        _
      $region60: #{transformer_decoder_forward.4} parent=11 // pred_fallthru
        _
      // Predicated region
      $region61: #{transformer_decoder_forward.4} parent=11 // pred_check
        %p631 = pneg %p407
      $region62: #{transformer_decoder_forward.4} parent=11 // pred_check_branch
        %633 = sbr.rel (%p631) target = $region64
      $region63: #{transformer_decoder_forward.4} parent=11 // pred_region
        _
      $region64: #{transformer_decoder_forward.4} parent=11 // pred_fallthru
        _
      // Predicated region
      $region65: #{transformer_decoder_forward.4} parent=11 // pred_check
        %p634 = pneg %p428
      $region66: #{transformer_decoder_forward.4} parent=11 // pred_check_branch
        %636 = sbr.rel (%p634) target = $region68
      $region67: #{transformer_decoder_forward.4} parent=11 // pred_region
        _
      $region68: #{transformer_decoder_forward.4} parent=11 // pred_fallthru
        _
      // Predicated region
      $region69: #{transformer_decoder_forward.4} parent=11 // pred_check
        %p637 = pneg %p449
      $region70: #{transformer_decoder_forward.4} parent=11 // pred_check_branch
        %639 = sbr.rel (%p637) target = $region72
      $region71: #{transformer_decoder_forward.4} parent=11 // pred_region
        _
      $region72: #{transformer_decoder_forward.4} parent=11 // pred_fallthru
        _
      // Predicated region
      $region73: #{transformer_decoder_forward.4} parent=11 // pred_check
        %p640 = pneg %p470
      $region74: #{transformer_decoder_forward.4} parent=11 // pred_check_branch
        %642 = sbr.rel (%p640) target = $region76
      $region75: #{transformer_decoder_forward.4} parent=11 // pred_region
        _
      $region76: #{transformer_decoder_forward.4} parent=11 // pred_fallthru
        _
      // Predicated region
      $region77: #{transformer_decoder_forward.4} parent=11 // pred_check
        %p643 = pneg %p491
      $region78: #{transformer_decoder_forward.4} parent=11 // pred_check_branch
        %645 = sbr.rel (%p643) target = $region80
      $region79: #{transformer_decoder_forward.4} parent=11 // pred_region
        _
      $region80: #{transformer_decoder_forward.4} parent=11 // pred_fallthru
        _
      // Predicated region
      $region81: #{transformer_decoder_forward.4} parent=11 // pred_check
        %p646 = pneg %p512
      $region82: #{transformer_decoder_forward.4} parent=11 // pred_check_branch
        %648 = sbr.rel (%p646) target = $region84
      $region83: #{transformer_decoder_forward.4} parent=11 // pred_region
        _
      $region84: #{transformer_decoder_forward.4} parent=11 // pred_fallthru
        _
      // Predicated region
      $region85: #{transformer_decoder_forward.4} parent=11 // pred_check
        %p649 = pneg %p533
      $region86: #{transformer_decoder_forward.4} parent=11 // pred_check_branch
        %651 = sbr.rel (%p649) target = $region88
      $region87: #{transformer_decoder_forward.4} parent=11 // pred_region
        _
      $region88: #{transformer_decoder_forward.4} parent=11 // pred_fallthru
        _
      // Predicated region
      $region89: #{transformer_decoder_forward.4} parent=11 // pred_check
        %p652 = pneg %p554
      $region90: #{transformer_decoder_forward.4} parent=11 // pred_check_branch
        %654 = sbr.rel (%p652) target = $region92
      $region91: #{transformer_decoder_forward.4} parent=11 // pred_region
        _
      $region92: #{transformer_decoder_forward.4} parent=11 // pred_fallthru
        _
    $region12: #{transformer_decoder_forward.4} parent=5 // pred_fallthru
      _
    %p655 = scmp.lt.s32.totalorder %s30, 2
    // Predicated region
    $region93: #{transformer_decoder_forward.4} parent=5 // pred_check
      %p656 = pneg %p655
    $region94: #{transformer_decoder_forward.4} parent=5 // pred_check_branch
      %658 = sbr.rel (%p656) target = $region96
    $region95: #{transformer_decoder_forward.4} parent=5 // pred_region
      // Predicated region
      $region97: #{transformer_decoder_forward.4} parent=95 // pred_check
        %p659 = pneg %p50
      $region98: #{transformer_decoder_forward.4} parent=95 // pred_check_branch
        %661 = sbr.rel (%p659) target = $region100
      $region99: #{transformer_decoder_forward.4} parent=95 // pred_region
        %p662 = scmp.lt.s32.totalorder %s30, 1
        %s663 = scalar_select %p662, %s30, 1
        %s664 = smul.addr %s663, 8
        %s665 = scalar_lea.vmem %s0, %s664
      $region100: #{transformer_decoder_forward.4} parent=95 // pred_fallthru
        _
      // Predicated region
      $region101: #{transformer_decoder_forward.4} parent=95 // pred_check
        %p666 = pneg %p76
      $region102: #{transformer_decoder_forward.4} parent=95 // pred_check_branch
        %668 = sbr.rel (%p666) target = $region104
      $region103: #{transformer_decoder_forward.4} parent=95 // pred_region
        %p669 = scmp.lt.s32.totalorder %s30, 1
        %s670 = scalar_select %p669, %s30, 1
        %s671 = smul.addr %s670, 8
        %s672 = scalar_lea.vmem %s1, %s671
      $region104: #{transformer_decoder_forward.4} parent=95 // pred_fallthru
        _
      // Predicated region
      $region105: #{transformer_decoder_forward.4} parent=95 // pred_check
        %p673 = pneg %p102
      $region106: #{transformer_decoder_forward.4} parent=95 // pred_check_branch
        %675 = sbr.rel (%p673) target = $region108
      $region107: #{transformer_decoder_forward.4} parent=95 // pred_region
        %p676 = scmp.lt.s32.totalorder %s30, 1
        %s677 = scalar_select %p676, %s30, 1
        %s678 = smul.addr %s677, 8
        %s679 = scalar_lea.vmem %s2, %s678
      $region108: #{transformer_decoder_forward.4} parent=95 // pred_fallthru
        _
      // Predicated region
      $region109: #{transformer_decoder_forward.4} parent=95 // pred_check
        %p680 = pneg %p128
      $region110: #{transformer_decoder_forward.4} parent=95 // pred_check_branch
        %682 = sbr.rel (%p680) target = $region112
      $region111: #{transformer_decoder_forward.4} parent=95 // pred_region
        %p683 = scmp.lt.s32.totalorder %s30, 1
        %s684 = scalar_select %p683, %s30, 1
        %s685 = scalar_lea.vmem %s3, %s684
      $region112: #{transformer_decoder_forward.4} parent=95 // pred_fallthru
        _
    $region96: #{transformer_decoder_forward.4} parent=5 // pred_fallthru
      _
    %p686 = scmp.le.s32.totalorder 1, %s30
    %p687 = scmp.lt.s32.totalorder %s30, 3
    %p688 = pnand %p686, %p687
    %p689 = pneg %p688
    // Predicated region
    $region113: #{transformer_decoder_forward.4} parent=5 // pred_check
      _
    $region114: #{transformer_decoder_forward.4} parent=5 // pred_check_branch
      %691 = sbr.rel (%p688) target = $region116
    $region115: #{transformer_decoder_forward.4} parent=5 // pred_region
      %s692 = ssub.s32 %s30, 1
      %p693 = scmp.lt.s32.totalorder %s35, 1
      %s694 = scalar_select %p693, %s35, 1
      %s695 = smul.addr %s694, 8
      %s696 = scalar_lea.vmem %s0, %s695
      %p697 = pneg %p56
      %p698 = pneg %p53
      %p699 = scmp.lt.s32.totalorder %s35, 1
      %s700 = scalar_select %p699, %s35, 1
      %s701 = smul.addr %s700, 8
      %s702 = scalar_lea.vmem %s1, %s701
      %p703 = pneg %p82
      %p704 = pneg %p79
      %p705 = scmp.lt.s32.totalorder %s35, 1
      %s706 = scalar_select %p705, %s35, 1
      %s707 = smul.addr %s706, 8
      %s708 = scalar_lea.vmem %s2, %s707
      %p709 = pneg %p108
      %p710 = pneg %p105
      %p711 = scmp.lt.s32.totalorder %s35, 1
      %s712 = scalar_select %p711, %s35, 1
      %s713 = scalar_lea.vmem %s3, %s712
      %p714 = pneg %p134
      %p715 = pneg %p131
      %p716 = pneg %p155
      %p717 = pneg %p152
      %p718 = pneg %p176
      %p719 = pneg %p173
      %p720 = pneg %p197
      %p721 = pneg %p194
      %p722 = pneg %p218
      %p723 = pneg %p215
      %p724 = pneg %p239
      %p725 = pneg %p236
      %p726 = pneg %p260
      %p727 = pneg %p257
      %p728 = pneg %p281
      %p729 = pneg %p278
      %p730 = pneg %p302
      %p731 = pneg %p299
      %p732 = pneg %p323
      %p733 = pneg %p320
      %p734 = pneg %p344
      %p735 = pneg %p341
      %p736 = pneg %p365
      %p737 = pneg %p362
      %p738 = pneg %p386
      %p739 = pneg %p383
      %p740 = pneg %p407
      %p741 = pneg %p404
      %p742 = pneg %p428
      %p743 = pneg %p425
      %p744 = pneg %p449
      %p745 = pneg %p446
      %p746 = pneg %p470
      %p747 = pneg %p467
      %p748 = pneg %p491
      %p749 = pneg %p488
      %p750 = pneg %p512
      %p751 = pneg %p509
      %p752 = pneg %p533
      %p753 = pneg %p530
      %p754 = pneg %p554
      %p755 = pneg %p551
      %p756 = pneg %p580
      %p757 = pneg %p577
      %p758 = scmp.lt.s32.totalorder %s35, 1
      %s759 = scalar_select %p758, %s35, 1
      %s760 = smul.addr %s759, 8
      %s761 = scalar_lea.vmem %s24, %s760
      %p762 = scmp.lt.s32.totalorder %s35, 1
      %s763 = scalar_select %p762, %s35, 1
      %s764 = smul.addr %s763, 8
      %s765 = scalar_lea.vmem %s0, %s764
      %p766 = scmp.lt.s32.totalorder %s35, 1
      %s767 = scalar_select %p766, %s35, 1
      %s768 = smul.addr %s767, 8
      %s769 = scalar_lea.vmem %s1, %s768
      %p770 = scmp.lt.s32.totalorder %s35, 1
      %s771 = scalar_select %p770, %s35, 1
      %s772 = smul.addr %s771, 8
      %s773 = scalar_lea.vmem %s2, %s772
      %p774 = scmp.lt.s32.totalorder %s35, 1
      %s775 = scalar_select %p774, %s35, 1
      %s776 = scalar_lea.vmem %s3, %s775
      %p777 = scmp.lt.s32.totalorder %s35, 1
      %s778 = scalar_select %p777, %s35, 1
      %s779 = smul.addr %s778, 8
      %s780 = scalar_lea.vmem %s24, %s779
      %v781 = vld [vmem:[%s765] sm:$0xff]
      %v782 = vld [vmem:[%s769] sm:$0xff]
      %v783 = vld [vmem:[%s773] sm:$0xff]
      %v784 = vld [vmem:[%s776] sm:$0x1]
      %v785 = vld [vmem:[%s4] sm:$0xff]
      %v786 = vld [vmem:[%s4 + $0x8] sm:$0xff]
      %v787 = vld [vmem:[%s4 + $0x10] sm:$0xff]
      %v788 = vld [vmem:[%s4 + $0x18] sm:$0xff]
      %v789 = vld [vmem:[%s5] sm:$0x1]
      %v791 = vlaneseq
      %v792 = vshrl.u32 %v791, 7
      %v793 = vsub.s32 0, %v792
      %v794 = vrot.slane %v789, %v793
      %vm796 = vcmask 261120
      %v798 = vsel %vm796, %v781, 0
      %800 = vmatprep.subr.mxu0 0.0
      %801 = vmatpush1.msra.mxu0 %v785
      %802 = vmatprep.subr.mxu0 0.0
      %803 = vmatpush1.msra.mxu0 %v786
      %804 = vmatprep.subr.mxu0 0.0
      %805 = vmatpush1.msra.mxu0 %v787
      %806 = vmatprep.subr.mxu0 0.0
      %807 = vmatpush1.msra.mxu0 %v788
      %808 = vmatprep.subr.mxu0 0.0
      %809 = vmatpush1.msra.mxu0 0.0
      %810 = vmatprep.subr.mxu0 0.0
      %811 = vmatpush1.msra.mxu0 0.0
      %812 = vmatprep.subr.mxu0 0.0
      %813 = vmatpush1.msra.mxu0 0.0
      %814 = vmatprep.subr.mxu0 0.0
      %815 = vmatpush1.msra.mxu0 0.0
      %816 = vmatprep.subr.mxu0 0.0
      %817 = vmatpush1.msra.mxu0 0.0
      %818 = vmatprep.subr.mxu0 0.0
      %819 = vmatpush1.msra.mxu0 0.0
      %820 = vmatprep.subr.mxu0 0.0
      %821 = vmatpush1.msra.mxu0 0.0
      %822 = vmatprep.subr.mxu0 0.0
      %823 = vmatpush1.msra.mxu0 0.0
      %824 = vmatprep.subr.mxu0 0.0
      %825 = vmatpush1.msra.mxu0 0.0
      %826 = vmatprep.subr.mxu0 0.0
      %827 = vmatpush1.msra.mxu0 0.0
      %828 = vmatprep.subr.mxu0 0.0
      %829 = vmatpush1.msra.mxu0 0.0
      %830 = vmatprep.subr.mxu0 0.0
      %831 = vmatpush1.msra.mxu0 0.0
      %832 = vmatprep.subr.mxu0 0.0
      %833 = vmatpush1.msra.mxu0 0.0
      %834 = vmatprep.subr.mxu0 0.0
      %835 = vmatpush1.msra.mxu0 0.0
      %836 = vmatprep.subr.mxu0 0.0
      %837 = vmatpush1.msra.mxu0 0.0
      %838 = vmatprep.subr.mxu0 0.0
      %839 = vmatpush1.msra.mxu0 0.0
      %840 = vmatprep.subr.mxu0 0.0
      %841 = vmatpush1.msra.mxu0 0.0
      %842 = vmatprep.subr.mxu0 0.0
      %843 = vmatpush1.msra.mxu0 0.0
      %844 = vmatprep.subr.mxu0 0.0
      %845 = vmatpush1.msra.mxu0 0.0
      %846 = vmatprep.subr.mxu0 0.0
      %847 = vmatpush1.msra.mxu0 0.0
      %848 = vmatprep.subr.mxu0 0.0
      %849 = vmatpush1.msra.mxu0 0.0
      %850 = vmatprep.subr.mxu0 0.0
      %851 = vmatpush1.msra.mxu0 0.0
      %852 = vmatprep.subr.mxu0 0.0
      %853 = vmatpush1.msra.mxu0 0.0
      %854 = vmatprep.subr.mxu0 0.0
      %855 = vmatpush1.msra.mxu0 0.0
      %856 = vmatprep.subr.mxu0 0.0
      %857 = vmatpush1.msra.mxu0 0.0
      %858 = vmatprep.subr.mxu0 0.0
      %859 = vmatpush1.msra.mxu0 0.0
      %860 = vmatprep.subr.mxu0 0.0
      %861 = vmatpush1.msra.mxu0 0.0
      %862 = vmatprep.subr.mxu0 0.0
      %863 = vmatpush1.msra.mxu0 0.0
      %864 = vmatprep.mubr.f32.mxu0 0.0
      %865 = vmatmul.mubr.f32.gmra.mrb[0].mxu0 %v798
      %v866 = vpop.f32.mrb[0].mxu0
      %v867 = vadd.f32 %v794, %v866
      %v868 = vpop.f32.mrb[0].mxu0
      %869 = vdwg.mxu0
      %871 = vrot.lane.b32.xlu0 %v867, 96
      %v872 = vpop.permute.xlu0 %871
      %vm873 = vcmask 130048
      %v874 = vsel %vm873, %v867, 0
      %v876 = vsel %vm873, %v872, 0
      %878 = vmatprep.subr.mxu0 0.0
      %879 = vmatpush1.xpose.msra.mxu0 %v876
      %880 = vmatprep.subr.mxu0 0.0
      %881 = vmatpush1.xpose.msra.mxu0 0.0
      %882 = vmatprep.subr.mxu0 0.0
      %883 = vmatpush1.xpose.msra.mxu0 0.0
      %884 = vmatprep.subr.mxu0 0.0
      %885 = vmatpush1.xpose.msra.mxu0 0.0
      %886 = vmatprep.subr.mxu0 0.0
      %887 = vmatpush1.xpose.msra.mxu0 0.0
      %888 = vmatprep.subr.mxu0 0.0
      %889 = vmatpush1.xpose.msra.mxu0 0.0
      %890 = vmatprep.subr.mxu0 0.0
      %891 = vmatpush1.xpose.msra.mxu0 0.0
      %892 = vmatprep.subr.mxu0 0.0
      %893 = vmatpush1.xpose.msra.mxu0 0.0
      %894 = vmatprep.subr.mxu0 0.0
      %895 = vmatpush1.xpose.msra.mxu0 0.0
      %896 = vmatprep.subr.mxu0 0.0
      %897 = vmatpush1.xpose.msra.mxu0 0.0
      %898 = vmatprep.subr.mxu0 0.0
      %899 = vmatpush1.xpose.msra.mxu0 0.0
      %900 = vmatprep.subr.mxu0 0.0
      %901 = vmatpush1.xpose.msra.mxu0 0.0
      %902 = vmatprep.subr.mxu0 0.0
      %903 = vmatpush1.xpose.msra.mxu0 0.0
      %904 = vmatprep.subr.mxu0 0.0
      %905 = vmatpush1.xpose.msra.mxu0 0.0
      %906 = vmatprep.subr.mxu0 0.0
      %907 = vmatpush1.xpose.msra.mxu0 0.0
      %908 = vmatprep.subr.mxu0 0.0
      %909 = vmatpush1.xpose.msra.mxu0 0.0
      %910 = vmatprep.subr.mxu0 0.0
      %911 = vmatpush1.xpose.msra.mxu0 0.0
      %912 = vmatprep.subr.mxu0 0.0
      %913 = vmatpush1.xpose.msra.mxu0 0.0
      %914 = vmatprep.subr.mxu0 0.0
      %915 = vmatpush1.xpose.msra.mxu0 0.0
      %916 = vmatprep.subr.mxu0 0.0
      %917 = vmatpush1.xpose.msra.mxu0 0.0
      %918 = vmatprep.subr.mxu0 0.0
      %919 = vmatpush1.xpose.msra.mxu0 0.0
      %920 = vmatprep.subr.mxu0 0.0
      %921 = vmatpush1.xpose.msra.mxu0 0.0
      %922 = vmatprep.subr.mxu0 0.0
      %923 = vmatpush1.xpose.msra.mxu0 0.0
      %924 = vmatprep.subr.mxu0 0.0
      %925 = vmatpush1.xpose.msra.mxu0 0.0
      %926 = vmatprep.subr.mxu0 0.0
      %927 = vmatpush1.xpose.msra.mxu0 0.0
      %928 = vmatprep.subr.mxu0 0.0
      %929 = vmatpush1.xpose.msra.mxu0 0.0
      %930 = vmatprep.subr.mxu0 0.0
      %931 = vmatpush1.xpose.msra.mxu0 0.0
      %932 = vmatprep.subr.mxu0 0.0
      %933 = vmatpush1.xpose.msra.mxu0 0.0
      %934 = vmatprep.subr.mxu0 0.0
      %935 = vmatpush1.xpose.msra.mxu0 0.0
      %936 = vmatprep.subr.mxu0 0.0
      %937 = vmatpush1.xpose.msra.mxu0 0.0
      %938 = vmatprep.subr.mxu0 0.0
      %939 = vmatpush1.xpose.msra.mxu0 0.0
      %940 = vmatprep.subr.mxu0 0.0
      %941 = vmatpush1.xpose.msra.mxu0 0.0
      %942 = vmatprep.mubr.f32.mxu0 0.0
      %943 = vmatmul.mubr.f32.gmra.mrb[0].mxu0 %v874
      %v944 = vpop.f32.mrb[0].mxu0
      %v945 = vadd.f32 0.0, %v944
      %v946 = vpop.f32.mrb[0].mxu0
      %947 = vdwg.mxu0
      %v948 = vmul.f32 %v945, 0.25
      %v949 = vadd.f32 %v948, %v783
      %vm950 = vcmask 64512
      %v951 = vsel %vm950, %v949, -inf
      %952 = vmax.xlane.f32.xlu0 %v951
      %v953 = vpop.xlane.xlu0 %952
      %v954 = vsub.f32 %v949, %v953
      %v955 = vmul.f32 %v954, 1.442695
      %v956 = vpow.pop %v955
      %v957 = vsel %vm950, %v956, 0.0
      %958 = vadd.xlane.f32.xlu0 %v957
      %v959 = vpop.xlane.xlu0 %958
      %v960 = vrcp.pop %v959
      %v961 = vmul.f32 %v956, %v960
      %962 = vrot.lane.b32.xlu0 %v867, 64
      %v963 = vpop.permute.xlu0 %962
      %v966 = vsel %vm950, %v961, 0
      %968 = vmatprep.subr.mxu0 0.0
      %969 = vmatpush1.msra.mxu0 %v963
      %970 = vmatprep.subr.mxu0 0.0
      %971 = vmatpush1.msra.mxu0 0.0
      %972 = vmatprep.subr.mxu0 0.0
      %973 = vmatpush1.msra.mxu0 0.0
      %974 = vmatprep.subr.mxu0 0.0
      %975 = vmatpush1.msra.mxu0 0.0
      %976 = vmatprep.subr.mxu0 0.0
      %977 = vmatpush1.msra.mxu0 0.0
      %978 = vmatprep.subr.mxu0 0.0
      %979 = vmatpush1.msra.mxu0 0.0
      %980 = vmatprep.subr.mxu0 0.0
      %981 = vmatpush1.msra.mxu0 0.0
      %982 = vmatprep.subr.mxu0 0.0
      %983 = vmatpush1.msra.mxu0 0.0
      %984 = vmatprep.subr.mxu0 0.0
      %985 = vmatpush1.msra.mxu0 0.0
      %986 = vmatprep.subr.mxu0 0.0
      %987 = vmatpush1.msra.mxu0 0.0
      %988 = vmatprep.subr.mxu0 0.0
      %989 = vmatpush1.msra.mxu0 0.0
      %990 = vmatprep.subr.mxu0 0.0
      %991 = vmatpush1.msra.mxu0 0.0
      %992 = vmatprep.subr.mxu0 0.0
      %993 = vmatpush1.msra.mxu0 0.0
      %994 = vmatprep.subr.mxu0 0.0
      %995 = vmatpush1.msra.mxu0 0.0
      %996 = vmatprep.subr.mxu0 0.0
      %997 = vmatpush1.msra.mxu0 0.0
      %998 = vmatprep.subr.mxu0 0.0
      %999 = vmatpush1.msra.mxu0 0.0
      %1000 = vmatprep.subr.mxu0 0.0
      %1001 = vmatpush1.msra.mxu0 0.0
      %1002 = vmatprep.subr.mxu0 0.0
      %1003 = vmatpush1.msra.mxu0 0.0
      %1004 = vmatprep.subr.mxu0 0.0
      %1005 = vmatpush1.msra.mxu0 0.0
      %1006 = vmatprep.subr.mxu0 0.0
      %1007 = vmatpush1.msra.mxu0 0.0
      %1008 = vmatprep.subr.mxu0 0.0
      %1009 = vmatpush1.msra.mxu0 0.0
      %1010 = vmatprep.subr.mxu0 0.0
      %1011 = vmatpush1.msra.mxu0 0.0
      %1012 = vmatprep.subr.mxu0 0.0
      %1013 = vmatpush1.msra.mxu0 0.0
      %1014 = vmatprep.subr.mxu0 0.0
      %1015 = vmatpush1.msra.mxu0 0.0
      %1016 = vmatprep.subr.mxu0 0.0
      %1017 = vmatpush1.msra.mxu0 0.0
      %1018 = vmatprep.subr.mxu0 0.0
      %1019 = vmatpush1.msra.mxu0 0.0
      %1020 = vmatprep.subr.mxu0 0.0
      %1021 = vmatpush1.msra.mxu0 0.0
      %1022 = vmatprep.subr.mxu0 0.0
      %1023 = vmatpush1.msra.mxu0 0.0
      %1024 = vmatprep.subr.mxu0 0.0
      %1025 = vmatpush1.msra.mxu0 0.0
      %1026 = vmatprep.subr.mxu0 0.0
      %1027 = vmatpush1.msra.mxu0 0.0
      %1028 = vmatprep.subr.mxu0 0.0
      %1029 = vmatpush1.msra.mxu0 0.0
      %1030 = vmatprep.subr.mxu0 0.0
      %1031 = vmatpush1.msra.mxu0 0.0
      %1032 = vmatprep.mubr.f32.mxu0 0.0
      %1033 = vmatmul.mubr.f32.gmra.mrb[0].mxu0 %v966
      %v1034 = vpop.f32.mrb[0].mxu0
      %v1035 = vadd.f32 0.0, %v1034
      %v1036 = vpop.f32.mrb[0].mxu0
      %1037 = vdwg.mxu0
      %1038 = vst.msk [vmem:[#allocation2] sm:$0xff] %vm873, %v1035
      %1039 = vrot.lane.b32.xlu0 %v867, 112
      %v1040 = vpop.permute.xlu0 %1039
      %1041 = vrot.lane.b32.xlu0 %v867, 80
      %v1042 = vpop.permute.xlu0 %1041
      %v1043 = vsel %vm873, %v1040, 0
      %v1045 = vsel %vm873, %v1042, 0
      %1047 = vmatprep.subr.mxu0 0.0
      %1048 = vmatpush1.xpose.msra.mxu0 %v1045
      %1049 = vmatprep.subr.mxu0 0.0
      %1050 = vmatpush1.xpose.msra.mxu0 0.0
      %1051 = vmatprep.subr.mxu0 0.0
      %1052 = vmatpush1.xpose.msra.mxu0 0.0
      %1053 = vmatprep.subr.mxu0 0.0
      %1054 = vmatpush1.xpose.msra.mxu0 0.0
      %1055 = vmatprep.subr.mxu0 0.0
      %1056 = vmatpush1.xpose.msra.mxu0 0.0
      %1057 = vmatprep.subr.mxu0 0.0
      %1058 = vmatpush1.xpose.msra.mxu0 0.0
      %1059 = vmatprep.subr.mxu0 0.0
      %1060 = vmatpush1.xpose.msra.mxu0 0.0
      %1061 = vmatprep.subr.mxu0 0.0
      %1062 = vmatpush1.xpose.msra.mxu0 0.0
      %1063 = vmatprep.subr.mxu0 0.0
      %1064 = vmatpush1.xpose.msra.mxu0 0.0
      %1065 = vmatprep.subr.mxu0 0.0
      %1066 = vmatpush1.xpose.msra.mxu0 0.0
      %1067 = vmatprep.subr.mxu0 0.0
      %1068 = vmatpush1.xpose.msra.mxu0 0.0
      %1069 = vmatprep.subr.mxu0 0.0
      %1070 = vmatpush1.xpose.msra.mxu0 0.0
      %1071 = vmatprep.subr.mxu0 0.0
      %1072 = vmatpush1.xpose.msra.mxu0 0.0
      %1073 = vmatprep.subr.mxu0 0.0
      %1074 = vmatpush1.xpose.msra.mxu0 0.0
      %1075 = vmatprep.subr.mxu0 0.0
      %1076 = vmatpush1.xpose.msra.mxu0 0.0
      %1077 = vmatprep.subr.mxu0 0.0
      %1078 = vmatpush1.xpose.msra.mxu0 0.0
      %1079 = vmatprep.subr.mxu0 0.0
      %1080 = vmatpush1.xpose.msra.mxu0 0.0
      %1081 = vmatprep.subr.mxu0 0.0
      %1082 = vmatpush1.xpose.msra.mxu0 0.0
      %1083 = vmatprep.subr.mxu0 0.0
      %1084 = vmatpush1.xpose.msra.mxu0 0.0
      %1085 = vmatprep.subr.mxu0 0.0
      %1086 = vmatpush1.xpose.msra.mxu0 0.0
      %1087 = vmatprep.subr.mxu0 0.0
      %1088 = vmatpush1.xpose.msra.mxu0 0.0
      %1089 = vmatprep.subr.mxu0 0.0
      %1090 = vmatpush1.xpose.msra.mxu0 0.0
      %1091 = vmatprep.subr.mxu0 0.0
      %1092 = vmatpush1.xpose.msra.mxu0 0.0
      %1093 = vmatprep.subr.mxu0 0.0
      %1094 = vmatpush1.xpose.msra.mxu0 0.0
      %1095 = vmatprep.subr.mxu0 0.0
      %1096 = vmatpush1.xpose.msra.mxu0 0.0
      %1097 = vmatprep.subr.mxu0 0.0
      %1098 = vmatpush1.xpose.msra.mxu0 0.0
      %1099 = vmatprep.subr.mxu0 0.0
      %1100 = vmatpush1.xpose.msra.mxu0 0.0
      %1101 = vmatprep.subr.mxu0 0.0
      %1102 = vmatpush1.xpose.msra.mxu0 0.0
      %1103 = vmatprep.subr.mxu0 0.0
      %1104 = vmatpush1.xpose.msra.mxu0 0.0
      %1105 = vmatprep.subr.mxu0 0.0
      %1106 = vmatpush1.xpose.msra.mxu0 0.0
      %1107 = vmatprep.subr.mxu0 0.0
      %1108 = vmatpush1.xpose.msra.mxu0 0.0
      %1109 = vmatprep.subr.mxu0 0.0
      %1110 = vmatpush1.xpose.msra.mxu0 0.0
      %1111 = vmatprep.mubr.f32.mxu0 0.0
      %1112 = vmatmul.mubr.f32.gmra.mrb[0].mxu0 %v1043
      %v1113 = vpop.f32.mrb[0].mxu0
      %v1114 = vadd.f32 0.0, %v1113
      %v1115 = vpop.f32.mrb[0].mxu0
      %1116 = vdwg.mxu0
      %v1117 = vmul.f32 %v1114, 0.25
      %v1118 = vadd.f32 %v1117, %v783
      %v1119 = vsel %vm950, %v1118, -inf
      %1120 = vmax.xlane.f32.xlu0 %v1119
      %v1121 = vpop.xlane.xlu0 %1120
      %v1122 = vsub.f32 %v1118, %v1121
      %v1123 = vmul.f32 %v1122, 1.442695
      %v1124 = vpow.pop %v1123
      %v1125 = vsel %vm950, %v1124, 0.0
      %1126 = vadd.xlane.f32.xlu0 %v1125
      %v1127 = vpop.xlane.xlu0 %1126
      %v1128 = vrcp.pop %v1127
      %v1129 = vmul.f32 %v1124, %v1128
      %1130 = vrot.lane.b32.xlu0 %v867, 48
      %v1131 = vpop.permute.xlu0 %1130
      %v1134 = vsel %vm950, %v1129, 0
      %1136 = vmatprep.subr.mxu0 0.0
      %1137 = vmatpush1.msra.mxu0 %v1131
      %1138 = vmatprep.subr.mxu0 0.0
      %1139 = vmatpush1.msra.mxu0 0.0
      %1140 = vmatprep.subr.mxu0 0.0
      %1141 = vmatpush1.msra.mxu0 0.0
      %1142 = vmatprep.subr.mxu0 0.0
      %1143 = vmatpush1.msra.mxu0 0.0
      %1144 = vmatprep.subr.mxu0 0.0
      %1145 = vmatpush1.msra.mxu0 0.0
      %1146 = vmatprep.subr.mxu0 0.0
      %1147 = vmatpush1.msra.mxu0 0.0
      %1148 = vmatprep.subr.mxu0 0.0
      %1149 = vmatpush1.msra.mxu0 0.0
      %1150 = vmatprep.subr.mxu0 0.0
      %1151 = vmatpush1.msra.mxu0 0.0
      %1152 = vmatprep.subr.mxu0 0.0
      %1153 = vmatpush1.msra.mxu0 0.0
      %1154 = vmatprep.subr.mxu0 0.0
      %1155 = vmatpush1.msra.mxu0 0.0
      %1156 = vmatprep.subr.mxu0 0.0
      %1157 = vmatpush1.msra.mxu0 0.0
      %1158 = vmatprep.subr.mxu0 0.0
      %1159 = vmatpush1.msra.mxu0 0.0
      %1160 = vmatprep.subr.mxu0 0.0
      %1161 = vmatpush1.msra.mxu0 0.0
      %1162 = vmatprep.subr.mxu0 0.0
      %1163 = vmatpush1.msra.mxu0 0.0
      %1164 = vmatprep.subr.mxu0 0.0
      %1165 = vmatpush1.msra.mxu0 0.0
      %1166 = vmatprep.subr.mxu0 0.0
      %1167 = vmatpush1.msra.mxu0 0.0
      %1168 = vmatprep.subr.mxu0 0.0
      %1169 = vmatpush1.msra.mxu0 0.0
      %1170 = vmatprep.subr.mxu0 0.0
      %1171 = vmatpush1.msra.mxu0 0.0
      %1172 = vmatprep.subr.mxu0 0.0
      %1173 = vmatpush1.msra.mxu0 0.0
      %1174 = vmatprep.subr.mxu0 0.0
      %1175 = vmatpush1.msra.mxu0 0.0
      %1176 = vmatprep.subr.mxu0 0.0
      %1177 = vmatpush1.msra.mxu0 0.0
      %1178 = vmatprep.subr.mxu0 0.0
      %1179 = vmatpush1.msra.mxu0 0.0
      %1180 = vmatprep.subr.mxu0 0.0
      %1181 = vmatpush1.msra.mxu0 0.0
      %1182 = vmatprep.subr.mxu0 0.0
      %1183 = vmatpush1.msra.mxu0 0.0
      %1184 = vmatprep.subr.mxu0 0.0
      %1185 = vmatpush1.msra.mxu0 0.0
      %1186 = vmatprep.subr.mxu0 0.0
      %1187 = vmatpush1.msra.mxu0 0.0
      %1188 = vmatprep.subr.mxu0 0.0
      %1189 = vmatpush1.msra.mxu0 0.0
      %1190 = vmatprep.subr.mxu0 0.0
      %1191 = vmatpush1.msra.mxu0 0.0
      %1192 = vmatprep.subr.mxu0 0.0
      %1193 = vmatpush1.msra.mxu0 0.0
      %1194 = vmatprep.subr.mxu0 0.0
      %1195 = vmatpush1.msra.mxu0 0.0
      %1196 = vmatprep.subr.mxu0 0.0
      %1197 = vmatpush1.msra.mxu0 0.0
      %1198 = vmatprep.subr.mxu0 0.0
      %1199 = vmatpush1.msra.mxu0 0.0
      %1200 = vmatprep.mubr.f32.mxu0 0.0
      %1201 = vmatmul.mubr.f32.gmra.mrb[0].mxu0 %v1134
      %v1202 = vpop.f32.mrb[0].mxu0
      %v1203 = vadd.f32 0.0, %v1202
      %v1204 = vpop.f32.mrb[0].mxu0
      %1205 = vdwg.mxu0
      %1207 = vrot.lane.b32.xlu0 %v1203, 16
      %v1208 = vpop.permute.xlu0 %1207
      %vm1210 = vcmask 261248
      %1211 = vst.msk [vmem:[#allocation2] sm:$0xff] %vm1210, %v1208
      %v1212 = vld [vmem:[#allocation2] sm:$0xff]
      %v1213 = vld [vmem:[%s6] sm:$0xff]
      %v1214 = vld [vmem:[%s6 + $0x8] sm:$0xff]
      %v1215 = vld [vmem:[%s6 + $0x10] sm:$0xff]
      %v1216 = vld [vmem:[%s6 + $0x18] sm:$0xff]
      %v1217 = vld [vmem:[%s7] sm:$0x1]
      %v1219 = vlaneseq
      %v1220 = vshrl.u32 %v1219, 7
      %v1221 = vsub.s32 0, %v1220
      %v1222 = vrot.slane %v1217, %v1221
      %v1225 = vsel %vm796, %v1212, 0
      %1227 = vmatprep.subr.mxu0 0.0
      %1228 = vmatpush1.msra.mxu0 %v1213
      %1229 = vmatprep.subr.mxu0 0.0
      %1230 = vmatpush1.msra.mxu0 %v1214
      %1231 = vmatprep.subr.mxu0 0.0
      %1232 = vmatpush1.msra.mxu0 %v1215
      %1233 = vmatprep.subr.mxu0 0.0
      %1234 = vmatpush1.msra.mxu0 %v1216
      %1235 = vmatprep.subr.mxu0 0.0
      %1236 = vmatpush1.msra.mxu0 0.0
      %1237 = vmatprep.subr.mxu0 0.0
      %1238 = vmatpush1.msra.mxu0 0.0
      %1239 = vmatprep.subr.mxu0 0.0
      %1240 = vmatpush1.msra.mxu0 0.0
      %1241 = vmatprep.subr.mxu0 0.0
      %1242 = vmatpush1.msra.mxu0 0.0
      %1243 = vmatprep.subr.mxu0 0.0
      %1244 = vmatpush1.msra.mxu0 0.0
      %1245 = vmatprep.subr.mxu0 0.0
      %1246 = vmatpush1.msra.mxu0 0.0
      %1247 = vmatprep.subr.mxu0 0.0
      %1248 = vmatpush1.msra.mxu0 0.0
      %1249 = vmatprep.subr.mxu0 0.0
      %1250 = vmatpush1.msra.mxu0 0.0
      %1251 = vmatprep.subr.mxu0 0.0
      %1252 = vmatpush1.msra.mxu0 0.0
      %1253 = vmatprep.subr.mxu0 0.0
      %1254 = vmatpush1.msra.mxu0 0.0
      %1255 = vmatprep.subr.mxu0 0.0
      %1256 = vmatpush1.msra.mxu0 0.0
      %1257 = vmatprep.subr.mxu0 0.0
      %1258 = vmatpush1.msra.mxu0 0.0
      %1259 = vmatprep.subr.mxu0 0.0
      %1260 = vmatpush1.msra.mxu0 0.0
      %1261 = vmatprep.subr.mxu0 0.0
      %1262 = vmatpush1.msra.mxu0 0.0
      %1263 = vmatprep.subr.mxu0 0.0
      %1264 = vmatpush1.msra.mxu0 0.0
      %1265 = vmatprep.subr.mxu0 0.0
      %1266 = vmatpush1.msra.mxu0 0.0
      %1267 = vmatprep.subr.mxu0 0.0
      %1268 = vmatpush1.msra.mxu0 0.0
      %1269 = vmatprep.subr.mxu0 0.0
      %1270 = vmatpush1.msra.mxu0 0.0
      %1271 = vmatprep.subr.mxu0 0.0
      %1272 = vmatpush1.msra.mxu0 0.0
      %1273 = vmatprep.subr.mxu0 0.0
      %1274 = vmatpush1.msra.mxu0 0.0
      %1275 = vmatprep.subr.mxu0 0.0
      %1276 = vmatpush1.msra.mxu0 0.0
      %1277 = vmatprep.subr.mxu0 0.0
      %1278 = vmatpush1.msra.mxu0 0.0
      %1279 = vmatprep.subr.mxu0 0.0
      %1280 = vmatpush1.msra.mxu0 0.0
      %1281 = vmatprep.subr.mxu0 0.0
      %1282 = vmatpush1.msra.mxu0 0.0
      %1283 = vmatprep.subr.mxu0 0.0
      %1284 = vmatpush1.msra.mxu0 0.0
      %1285 = vmatprep.subr.mxu0 0.0
      %1286 = vmatpush1.msra.mxu0 0.0
      %1287 = vmatprep.subr.mxu0 0.0
      %1288 = vmatpush1.msra.mxu0 0.0
      %1289 = vmatprep.subr.mxu0 0.0
      %1290 = vmatpush1.msra.mxu0 0.0
      %1291 = vmatprep.mubr.f32.mxu0 0.0
      %1292 = vmatmul.mubr.f32.gmra.mrb[0].mxu0 %v1225
      %v1293 = vpop.f32.mrb[0].mxu0
      %v1294 = vadd.f32 %v1222, %v1293
      %v1295 = vpop.f32.mrb[0].mxu0
      %1296 = vdwg.mxu0
      %v1297 = vadd.f32 %v781, %v1294
      %v1298 = vsel %vm796, %v1297, 0.0
      %1299 = vadd.xlane.f32.xlu0 %v1298
      %v1300 = vpop.xlane.xlu0 %1299
      %v1301 = vrcp.pop 32.0
      %v1302 = vmul.f32 %v1300, %v1301
      %v1303 = vsub.f32 %v1297, %v1302
      %v1304 = vmul.f32 %v1303, %v1303
      %v1305 = vsel %vm796, %v1304, 0.0
      %1306 = vadd.xlane.f32.xlu0 %v1305
      %v1307 = vpop.xlane.xlu0 %1306
      %v1308 = vmul.f32 %v1307, %v1301
      %v1309 = vadd.f32 %v1308, 1e-05
      %v1310 = vrsqrt.pop %v1309
      %v1311 = vmul.f32 %v1303, %v1310
      %v1312 = vld [vmem:[%s18] sm:$0x1]
      %v1314 = vlaneseq
      %v1315 = vshrl.u32 %v1314, 7
      %v1316 = vsub.s32 0, %v1315
      %v1317 = vrot.slane %v1312, %v1316
      %v1319 = vmul.f32 %v1311, %v1317
      %v1320 = vld [vmem:[%s19] sm:$0x1]
      %v1322 = vlaneseq
      %v1323 = vshrl.u32 %v1322, 7
      %v1324 = vsub.s32 0, %v1323
      %v1325 = vrot.slane %v1320, %v1324
      %v1327 = vadd.f32 %v1319, %v1325
      %v1328 = vld [vmem:[%s8] sm:$0xff]
      %v1329 = vld [vmem:[%s8 + $0x8] sm:$0xff]
      %v1330 = vld [vmem:[%s8 + $0x10] sm:$0xff]
      %v1331 = vld [vmem:[%s8 + $0x18] sm:$0xff]
      %v1332 = vld [vmem:[%s9] sm:$0x1]
      %v1334 = vlaneseq
      %v1335 = vshrl.u32 %v1334, 7
      %v1336 = vsub.s32 0, %v1335
      %v1337 = vrot.slane %v1332, %v1336
      %v1340 = vsel %vm796, %v1327, 0
      %1342 = vmatprep.subr.mxu0 0.0
      %1343 = vmatpush1.msra.mxu0 %v1328
      %1344 = vmatprep.subr.mxu0 0.0
      %1345 = vmatpush1.msra.mxu0 %v1329
      %1346 = vmatprep.subr.mxu0 0.0
      %1347 = vmatpush1.msra.mxu0 %v1330
      %1348 = vmatprep.subr.mxu0 0.0
      %1349 = vmatpush1.msra.mxu0 %v1331
      %1350 = vmatprep.subr.mxu0 0.0
      %1351 = vmatpush1.msra.mxu0 0.0
      %1352 = vmatprep.subr.mxu0 0.0
      %1353 = vmatpush1.msra.mxu0 0.0
      %1354 = vmatprep.subr.mxu0 0.0
      %1355 = vmatpush1.msra.mxu0 0.0
      %1356 = vmatprep.subr.mxu0 0.0
      %1357 = vmatpush1.msra.mxu0 0.0
      %1358 = vmatprep.subr.mxu0 0.0
      %1359 = vmatpush1.msra.mxu0 0.0
      %1360 = vmatprep.subr.mxu0 0.0
      %1361 = vmatpush1.msra.mxu0 0.0
      %1362 = vmatprep.subr.mxu0 0.0
      %1363 = vmatpush1.msra.mxu0 0.0
      %1364 = vmatprep.subr.mxu0 0.0
      %1365 = vmatpush1.msra.mxu0 0.0
      %1366 = vmatprep.subr.mxu0 0.0
      %1367 = vmatpush1.msra.mxu0 0.0
      %1368 = vmatprep.subr.mxu0 0.0
      %1369 = vmatpush1.msra.mxu0 0.0
      %1370 = vmatprep.subr.mxu0 0.0
      %1371 = vmatpush1.msra.mxu0 0.0
      %1372 = vmatprep.subr.mxu0 0.0
      %1373 = vmatpush1.msra.mxu0 0.0
      %1374 = vmatprep.subr.mxu0 0.0
      %1375 = vmatpush1.msra.mxu0 0.0
      %1376 = vmatprep.subr.mxu0 0.0
      %1377 = vmatpush1.msra.mxu0 0.0
      %1378 = vmatprep.subr.mxu0 0.0
      %1379 = vmatpush1.msra.mxu0 0.0
      %1380 = vmatprep.subr.mxu0 0.0
      %1381 = vmatpush1.msra.mxu0 0.0
      %1382 = vmatprep.subr.mxu0 0.0
      %1383 = vmatpush1.msra.mxu0 0.0
      %1384 = vmatprep.subr.mxu0 0.0
      %1385 = vmatpush1.msra.mxu0 0.0
      %1386 = vmatprep.subr.mxu0 0.0
      %1387 = vmatpush1.msra.mxu0 0.0
      %1388 = vmatprep.subr.mxu0 0.0
      %1389 = vmatpush1.msra.mxu0 0.0
      %1390 = vmatprep.subr.mxu0 0.0
      %1391 = vmatpush1.msra.mxu0 0.0
      %1392 = vmatprep.subr.mxu0 0.0
      %1393 = vmatpush1.msra.mxu0 0.0
      %1394 = vmatprep.subr.mxu0 0.0
      %1395 = vmatpush1.msra.mxu0 0.0
      %1396 = vmatprep.subr.mxu0 0.0
      %1397 = vmatpush1.msra.mxu0 0.0
      %1398 = vmatprep.subr.mxu0 0.0
      %1399 = vmatpush1.msra.mxu0 0.0
      %1400 = vmatprep.subr.mxu0 0.0
      %1401 = vmatpush1.msra.mxu0 0.0
      %1402 = vmatprep.subr.mxu0 0.0
      %1403 = vmatpush1.msra.mxu0 0.0
      %1404 = vmatprep.subr.mxu0 0.0
      %1405 = vmatpush1.msra.mxu0 0.0
      %1406 = vmatprep.mubr.f32.mxu0 0.0
      %1407 = vmatmul.mubr.f32.gmra.mrb[0].mxu0 %v1340
      %v1408 = vpop.f32.mrb[0].mxu0
      %v1409 = vadd.f32 %v1337, %v1408
      %v1410 = vpop.f32.mrb[0].mxu0
      %1411 = vdwg.mxu0
      %v1412 = vld [vmem:[%s10] sm:$0xff]
      %v1413 = vld [vmem:[%s10 + $0x8] sm:$0xff]
      %v1414 = vld [vmem:[%s10 + $0x10] sm:$0xff]
      %v1415 = vld [vmem:[%s10 + $0x18] sm:$0xff]
      %v1416 = vld [vmem:[%s11] sm:$0x1]
      %v1418 = vlaneseq
      %v1419 = vshrl.u32 %v1418, 7
      %v1420 = vsub.s32 0, %v1419
      %v1421 = vrot.slane %v1416, %v1420
      %v1424 = vsel %vm796, %v782, 0
      %1426 = vmatprep.subr.mxu0 0.0
      %1427 = vmatpush1.msra.mxu0 %v1412
      %1428 = vmatprep.subr.mxu0 0.0
      %1429 = vmatpush1.msra.mxu0 %v1413
      %1430 = vmatprep.subr.mxu0 0.0
      %1431 = vmatpush1.msra.mxu0 %v1414
      %1432 = vmatprep.subr.mxu0 0.0
      %1433 = vmatpush1.msra.mxu0 %v1415
      %1434 = vmatprep.subr.mxu0 0.0
      %1435 = vmatpush1.msra.mxu0 0.0
      %1436 = vmatprep.subr.mxu0 0.0
      %1437 = vmatpush1.msra.mxu0 0.0
      %1438 = vmatprep.subr.mxu0 0.0
      %1439 = vmatpush1.msra.mxu0 0.0
      %1440 = vmatprep.subr.mxu0 0.0
      %1441 = vmatpush1.msra.mxu0 0.0
      %1442 = vmatprep.subr.mxu0 0.0
      %1443 = vmatpush1.msra.mxu0 0.0
      %1444 = vmatprep.subr.mxu0 0.0
      %1445 = vmatpush1.msra.mxu0 0.0
      %1446 = vmatprep.subr.mxu0 0.0
      %1447 = vmatpush1.msra.mxu0 0.0
      %1448 = vmatprep.subr.mxu0 0.0
      %1449 = vmatpush1.msra.mxu0 0.0
      %1450 = vmatprep.subr.mxu0 0.0
      %1451 = vmatpush1.msra.mxu0 0.0
      %1452 = vmatprep.subr.mxu0 0.0
      %1453 = vmatpush1.msra.mxu0 0.0
      %1454 = vmatprep.subr.mxu0 0.0
      %1455 = vmatpush1.msra.mxu0 0.0
      %1456 = vmatprep.subr.mxu0 0.0
      %1457 = vmatpush1.msra.mxu0 0.0
      %1458 = vmatprep.subr.mxu0 0.0
      %1459 = vmatpush1.msra.mxu0 0.0
      %1460 = vmatprep.subr.mxu0 0.0
      %1461 = vmatpush1.msra.mxu0 0.0
      %1462 = vmatprep.subr.mxu0 0.0
      %1463 = vmatpush1.msra.mxu0 0.0
      %1464 = vmatprep.subr.mxu0 0.0
      %1465 = vmatpush1.msra.mxu0 0.0
      %1466 = vmatprep.subr.mxu0 0.0
      %1467 = vmatpush1.msra.mxu0 0.0
      %1468 = vmatprep.subr.mxu0 0.0
      %1469 = vmatpush1.msra.mxu0 0.0
      %1470 = vmatprep.subr.mxu0 0.0
      %1471 = vmatpush1.msra.mxu0 0.0
      %1472 = vmatprep.subr.mxu0 0.0
      %1473 = vmatpush1.msra.mxu0 0.0
      %1474 = vmatprep.subr.mxu0 0.0
      %1475 = vmatpush1.msra.mxu0 0.0
      %1476 = vmatprep.subr.mxu0 0.0
      %1477 = vmatpush1.msra.mxu0 0.0
      %1478 = vmatprep.subr.mxu0 0.0
      %1479 = vmatpush1.msra.mxu0 0.0
      %1480 = vmatprep.subr.mxu0 0.0
      %1481 = vmatpush1.msra.mxu0 0.0
      %1482 = vmatprep.subr.mxu0 0.0
      %1483 = vmatpush1.msra.mxu0 0.0
      %1484 = vmatprep.subr.mxu0 0.0
      %1485 = vmatpush1.msra.mxu0 0.0
      %1486 = vmatprep.subr.mxu0 0.0
      %1487 = vmatpush1.msra.mxu0 0.0
      %1488 = vmatprep.subr.mxu0 0.0
      %1489 = vmatpush1.msra.mxu0 0.0
      %1490 = vmatprep.mubr.f32.mxu0 0.0
      %1491 = vmatmul.mubr.f32.gmra.mrb[0].mxu0 %v1424
      %v1492 = vpop.f32.mrb[0].mxu0
      %v1493 = vadd.f32 %v1421, %v1492
      %v1494 = vpop.f32.mrb[0].mxu0
      %1495 = vdwg.mxu0
      %v1497 = vsel %vm873, %v1409, 0
      %v1500 = vsel %vm873, %v1493, 0
      %1502 = vmatprep.subr.mxu0 0.0
      %1503 = vmatpush1.xpose.msra.mxu0 %v1500
      %1504 = vmatprep.subr.mxu0 0.0
      %1505 = vmatpush1.xpose.msra.mxu0 0.0
      %1506 = vmatprep.subr.mxu0 0.0
      %1507 = vmatpush1.xpose.msra.mxu0 0.0
      %1508 = vmatprep.subr.mxu0 0.0
      %1509 = vmatpush1.xpose.msra.mxu0 0.0
      %1510 = vmatprep.subr.mxu0 0.0
      %1511 = vmatpush1.xpose.msra.mxu0 0.0
      %1512 = vmatprep.subr.mxu0 0.0
      %1513 = vmatpush1.xpose.msra.mxu0 0.0
      %1514 = vmatprep.subr.mxu0 0.0
      %1515 = vmatpush1.xpose.msra.mxu0 0.0
      %1516 = vmatprep.subr.mxu0 0.0
      %1517 = vmatpush1.xpose.msra.mxu0 0.0
      %1518 = vmatprep.subr.mxu0 0.0
      %1519 = vmatpush1.xpose.msra.mxu0 0.0
      %1520 = vmatprep.subr.mxu0 0.0
      %1521 = vmatpush1.xpose.msra.mxu0 0.0
      %1522 = vmatprep.subr.mxu0 0.0
      %1523 = vmatpush1.xpose.msra.mxu0 0.0
      %1524 = vmatprep.subr.mxu0 0.0
      %1525 = vmatpush1.xpose.msra.mxu0 0.0
      %1526 = vmatprep.subr.mxu0 0.0
      %1527 = vmatpush1.xpose.msra.mxu0 0.0
      %1528 = vmatprep.subr.mxu0 0.0
      %1529 = vmatpush1.xpose.msra.mxu0 0.0
      %1530 = vmatprep.subr.mxu0 0.0
      %1531 = vmatpush1.xpose.msra.mxu0 0.0
      %1532 = vmatprep.subr.mxu0 0.0
      %1533 = vmatpush1.xpose.msra.mxu0 0.0
      %1534 = vmatprep.subr.mxu0 0.0
      %1535 = vmatpush1.xpose.msra.mxu0 0.0
      %1536 = vmatprep.subr.mxu0 0.0
      %1537 = vmatpush1.xpose.msra.mxu0 0.0
      %1538 = vmatprep.subr.mxu0 0.0
      %1539 = vmatpush1.xpose.msra.mxu0 0.0
      %1540 = vmatprep.subr.mxu0 0.0
      %1541 = vmatpush1.xpose.msra.mxu0 0.0
      %1542 = vmatprep.subr.mxu0 0.0
      %1543 = vmatpush1.xpose.msra.mxu0 0.0
      %1544 = vmatprep.subr.mxu0 0.0
      %1545 = vmatpush1.xpose.msra.mxu0 0.0
      %1546 = vmatprep.subr.mxu0 0.0
      %1547 = vmatpush1.xpose.msra.mxu0 0.0
      %1548 = vmatprep.subr.mxu0 0.0
      %1549 = vmatpush1.xpose.msra.mxu0 0.0
      %1550 = vmatprep.subr.mxu0 0.0
      %1551 = vmatpush1.xpose.msra.mxu0 0.0
      %1552 = vmatprep.subr.mxu0 0.0
      %1553 = vmatpush1.xpose.msra.mxu0 0.0
      %1554 = vmatprep.subr.mxu0 0.0
      %1555 = vmatpush1.xpose.msra.mxu0 0.0
      %1556 = vmatprep.subr.mxu0 0.0
      %1557 = vmatpush1.xpose.msra.mxu0 0.0
      %1558 = vmatprep.subr.mxu0 0.0
      %1559 = vmatpush1.xpose.msra.mxu0 0.0
      %1560 = vmatprep.subr.mxu0 0.0
      %1561 = vmatpush1.xpose.msra.mxu0 0.0
      %1562 = vmatprep.subr.mxu0 0.0
      %1563 = vmatpush1.xpose.msra.mxu0 0.0
      %1564 = vmatprep.subr.mxu0 0.0
      %1565 = vmatpush1.xpose.msra.mxu0 0.0
      %1566 = vmatprep.mubr.f32.mxu0 0.0
      %1567 = vmatmul.mubr.f32.gmra.mrb[0].mxu0 %v1497
      %v1568 = vpop.f32.mrb[0].mxu0
      %v1569 = vadd.f32 0.0, %v1568
      %v1570 = vpop.f32.mrb[0].mxu0
      %1571 = vdwg.mxu0
      %v1572 = vmul.f32 %v1569, 0.25
      %v1574 = vlaneseq
      %v1575 = vshrl.u32 %v1574, 7
      %v1576 = vsub.s32 0, %v1575
      %v1577 = vrot.slane %v784, %v1576
      %v1579 = vadd.f32 %v1572, %v1577
      %v1580 = vsel %vm950, %v1579, -inf
      %1581 = vmax.xlane.f32.xlu0 %v1580
      %v1582 = vpop.xlane.xlu0 %1581
      %v1583 = vsub.f32 %v1579, %v1582
      %v1584 = vmul.f32 %v1583, 1.442695
      %v1585 = vpow.pop %v1584
      %v1586 = vsel %vm950, %v1585, 0.0
      %1587 = vadd.xlane.f32.xlu0 %v1586
      %v1588 = vpop.xlane.xlu0 %1587
      %v1589 = vrcp.pop %v1588
      %v1590 = vmul.f32 %v1585, %v1589
      %1591 = vrot.lane.b32.xlu0 %v1493, 96
      %v1592 = vpop.permute.xlu0 %1591
      %v1595 = vsel %vm950, %v1590, 0
      %1597 = vmatprep.subr.mxu0 0.0
      %1598 = vmatpush1.msra.mxu0 %v1592
      %1599 = vmatprep.subr.mxu0 0.0
      %1600 = vmatpush1.msra.mxu0 0.0
      %1601 = vmatprep.subr.mxu0 0.0
      %1602 = vmatpush1.msra.mxu0 0.0
      %1603 = vmatprep.subr.mxu0 0.0
      %1604 = vmatpush1.msra.mxu0 0.0
      %1605 = vmatprep.subr.mxu0 0.0
      %1606 = vmatpush1.msra.mxu0 0.0
      %1607 = vmatprep.subr.mxu0 0.0
      %1608 = vmatpush1.msra.mxu0 0.0
      %1609 = vmatprep.subr.mxu0 0.0
      %1610 = vmatpush1.msra.mxu0 0.0
      %1611 = vmatprep.subr.mxu0 0.0
      %1612 = vmatpush1.msra.mxu0 0.0
      %1613 = vmatprep.subr.mxu0 0.0
      %1614 = vmatpush1.msra.mxu0 0.0
      %1615 = vmatprep.subr.mxu0 0.0
      %1616 = vmatpush1.msra.mxu0 0.0
      %1617 = vmatprep.subr.mxu0 0.0
      %1618 = vmatpush1.msra.mxu0 0.0
      %1619 = vmatprep.subr.mxu0 0.0
      %1620 = vmatpush1.msra.mxu0 0.0
      %1621 = vmatprep.subr.mxu0 0.0
      %1622 = vmatpush1.msra.mxu0 0.0
      %1623 = vmatprep.subr.mxu0 0.0
      %1624 = vmatpush1.msra.mxu0 0.0
      %1625 = vmatprep.subr.mxu0 0.0
      %1626 = vmatpush1.msra.mxu0 0.0
      %1627 = vmatprep.subr.mxu0 0.0
      %1628 = vmatpush1.msra.mxu0 0.0
      %1629 = vmatprep.subr.mxu0 0.0
      %1630 = vmatpush1.msra.mxu0 0.0
      %1631 = vmatprep.subr.mxu0 0.0
      %1632 = vmatpush1.msra.mxu0 0.0
      %1633 = vmatprep.subr.mxu0 0.0
      %1634 = vmatpush1.msra.mxu0 0.0
      %1635 = vmatprep.subr.mxu0 0.0
      %1636 = vmatpush1.msra.mxu0 0.0
      %1637 = vmatprep.subr.mxu0 0.0
      %1638 = vmatpush1.msra.mxu0 0.0
      %1639 = vmatprep.subr.mxu0 0.0
      %1640 = vmatpush1.msra.mxu0 0.0
      %1641 = vmatprep.subr.mxu0 0.0
      %1642 = vmatpush1.msra.mxu0 0.0
      %1643 = vmatprep.subr.mxu0 0.0
      %1644 = vmatpush1.msra.mxu0 0.0
      %1645 = vmatprep.subr.mxu0 0.0
      %1646 = vmatpush1.msra.mxu0 0.0
      %1647 = vmatprep.subr.mxu0 0.0
      %1648 = vmatpush1.msra.mxu0 0.0
      %1649 = vmatprep.subr.mxu0 0.0
      %1650 = vmatpush1.msra.mxu0 0.0
      %1651 = vmatprep.subr.mxu0 0.0
      %1652 = vmatpush1.msra.mxu0 0.0
      %1653 = vmatprep.subr.mxu0 0.0
      %1654 = vmatpush1.msra.mxu0 0.0
      %1655 = vmatprep.subr.mxu0 0.0
      %1656 = vmatpush1.msra.mxu0 0.0
      %1657 = vmatprep.subr.mxu0 0.0
      %1658 = vmatpush1.msra.mxu0 0.0
      %1659 = vmatprep.subr.mxu0 0.0
      %1660 = vmatpush1.msra.mxu0 0.0
      %1661 = vmatprep.mubr.f32.mxu0 0.0
      %1662 = vmatmul.mubr.f32.gmra.mrb[0].mxu0 %v1595
      %v1663 = vpop.f32.mrb[0].mxu0
      %v1664 = vadd.f32 0.0, %v1663
      %v1665 = vpop.f32.mrb[0].mxu0
      %1666 = vdwg.mxu0
      %1667 = vst.msk [vmem:[#allocation2] sm:$0xff] %vm873, %v1664
      %1668 = vrot.lane.b32.xlu0 %v1409, 112
      %v1669 = vpop.permute.xlu0 %1668
      %1670 = vrot.lane.b32.xlu0 %v1493, 112
      %v1671 = vpop.permute.xlu0 %1670
      %v1672 = vsel %vm873, %v1669, 0
      %v1674 = vsel %vm873, %v1671, 0
      %1676 = vmatprep.subr.mxu0 0.0
      %1677 = vmatpush1.xpose.msra.mxu0 %v1674
      %1678 = vmatprep.subr.mxu0 0.0
      %1679 = vmatpush1.xpose.msra.mxu0 0.0
      %1680 = vmatprep.subr.mxu0 0.0
      %1681 = vmatpush1.xpose.msra.mxu0 0.0
      %1682 = vmatprep.subr.mxu0 0.0
      %1683 = vmatpush1.xpose.msra.mxu0 0.0
      %1684 = vmatprep.subr.mxu0 0.0
      %1685 = vmatpush1.xpose.msra.mxu0 0.0
      %1686 = vmatprep.subr.mxu0 0.0
      %1687 = vmatpush1.xpose.msra.mxu0 0.0
      %1688 = vmatprep.subr.mxu0 0.0
      %1689 = vmatpush1.xpose.msra.mxu0 0.0
      %1690 = vmatprep.subr.mxu0 0.0
      %1691 = vmatpush1.xpose.msra.mxu0 0.0
      %1692 = vmatprep.subr.mxu0 0.0
      %1693 = vmatpush1.xpose.msra.mxu0 0.0
      %1694 = vmatprep.subr.mxu0 0.0
      %1695 = vmatpush1.xpose.msra.mxu0 0.0
      %1696 = vmatprep.subr.mxu0 0.0
      %1697 = vmatpush1.xpose.msra.mxu0 0.0
      %1698 = vmatprep.subr.mxu0 0.0
      %1699 = vmatpush1.xpose.msra.mxu0 0.0
      %1700 = vmatprep.subr.mxu0 0.0
      %1701 = vmatpush1.xpose.msra.mxu0 0.0
      %1702 = vmatprep.subr.mxu0 0.0
      %1703 = vmatpush1.xpose.msra.mxu0 0.0
      %1704 = vmatprep.subr.mxu0 0.0
      %1705 = vmatpush1.xpose.msra.mxu0 0.0
      %1706 = vmatprep.subr.mxu0 0.0
      %1707 = vmatpush1.xpose.msra.mxu0 0.0
      %1708 = vmatprep.subr.mxu0 0.0
      %1709 = vmatpush1.xpose.msra.mxu0 0.0
      %1710 = vmatprep.subr.mxu0 0.0
      %1711 = vmatpush1.xpose.msra.mxu0 0.0
      %1712 = vmatprep.subr.mxu0 0.0
      %1713 = vmatpush1.xpose.msra.mxu0 0.0
      %1714 = vmatprep.subr.mxu0 0.0
      %1715 = vmatpush1.xpose.msra.mxu0 0.0
      %1716 = vmatprep.subr.mxu0 0.0
      %1717 = vmatpush1.xpose.msra.mxu0 0.0
      %1718 = vmatprep.subr.mxu0 0.0
      %1719 = vmatpush1.xpose.msra.mxu0 0.0
      %1720 = vmatprep.subr.mxu0 0.0
      %1721 = vmatpush1.xpose.msra.mxu0 0.0
      %1722 = vmatprep.subr.mxu0 0.0
      %1723 = vmatpush1.xpose.msra.mxu0 0.0
      %1724 = vmatprep.subr.mxu0 0.0
      %1725 = vmatpush1.xpose.msra.mxu0 0.0
      %1726 = vmatprep.subr.mxu0 0.0
      %1727 = vmatpush1.xpose.msra.mxu0 0.0
      %1728 = vmatprep.subr.mxu0 0.0
      %1729 = vmatpush1.xpose.msra.mxu0 0.0
      %1730 = vmatprep.subr.mxu0 0.0
      %1731 = vmatpush1.xpose.msra.mxu0 0.0
      %1732 = vmatprep.subr.mxu0 0.0
      %1733 = vmatpush1.xpose.msra.mxu0 0.0
      %1734 = vmatprep.subr.mxu0 0.0
      %1735 = vmatpush1.xpose.msra.mxu0 0.0
      %1736 = vmatprep.subr.mxu0 0.0
      %1737 = vmatpush1.xpose.msra.mxu0 0.0
      %1738 = vmatprep.subr.mxu0 0.0
      %1739 = vmatpush1.xpose.msra.mxu0 0.0
      %1740 = vmatprep.mubr.f32.mxu0 0.0
      %1741 = vmatmul.mubr.f32.gmra.mrb[0].mxu0 %v1672
      %v1742 = vpop.f32.mrb[0].mxu0
      %v1743 = vadd.f32 0.0, %v1742
      %v1744 = vpop.f32.mrb[0].mxu0
      %1745 = vdwg.mxu0
      %v1746 = vmul.f32 %v1743, 0.25
      %v1747 = vadd.f32 %v1746, %v1577
      %v1748 = vsel %vm950, %v1747, -inf
      %1749 = vmax.xlane.f32.xlu0 %v1748
      %v1750 = vpop.xlane.xlu0 %1749
      %v1751 = vsub.f32 %v1747, %v1750
      %v1752 = vmul.f32 %v1751, 1.442695
      %v1753 = vpow.pop %v1752
      %v1754 = vsel %vm950, %v1753, 0.0
      %1755 = vadd.xlane.f32.xlu0 %v1754
      %v1756 = vpop.xlane.xlu0 %1755
      %v1757 = vrcp.pop %v1756
      %v1758 = vmul.f32 %v1753, %v1757
      %1759 = vrot.lane.b32.xlu0 %v1493, 80
      %v1760 = vpop.permute.xlu0 %1759
      %v1763 = vsel %vm950, %v1758, 0
      %1765 = vmatprep.subr.mxu0 0.0
      %1766 = vmatpush1.msra.mxu0 %v1760
      %1767 = vmatprep.subr.mxu0 0.0
      %1768 = vmatpush1.msra.mxu0 0.0
      %1769 = vmatprep.subr.mxu0 0.0
      %1770 = vmatpush1.msra.mxu0 0.0
      %1771 = vmatprep.subr.mxu0 0.0
      %1772 = vmatpush1.msra.mxu0 0.0
      %1773 = vmatprep.subr.mxu0 0.0
      %1774 = vmatpush1.msra.mxu0 0.0
      %1775 = vmatprep.subr.mxu0 0.0
      %1776 = vmatpush1.msra.mxu0 0.0
      %1777 = vmatprep.subr.mxu0 0.0
      %1778 = vmatpush1.msra.mxu0 0.0
      %1779 = vmatprep.subr.mxu0 0.0
      %1780 = vmatpush1.msra.mxu0 0.0
      %1781 = vmatprep.subr.mxu0 0.0
      %1782 = vmatpush1.msra.mxu0 0.0
      %1783 = vmatprep.subr.mxu0 0.0
      %1784 = vmatpush1.msra.mxu0 0.0
      %1785 = vmatprep.subr.mxu0 0.0
      %1786 = vmatpush1.msra.mxu0 0.0
      %1787 = vmatprep.subr.mxu0 0.0
      %1788 = vmatpush1.msra.mxu0 0.0
      %1789 = vmatprep.subr.mxu0 0.0
      %1790 = vmatpush1.msra.mxu0 0.0
      %1791 = vmatprep.subr.mxu0 0.0
      %1792 = vmatpush1.msra.mxu0 0.0
      %1793 = vmatprep.subr.mxu0 0.0
      %1794 = vmatpush1.msra.mxu0 0.0
      %1795 = vmatprep.subr.mxu0 0.0
      %1796 = vmatpush1.msra.mxu0 0.0
      %1797 = vmatprep.subr.mxu0 0.0
      %1798 = vmatpush1.msra.mxu0 0.0
      %1799 = vmatprep.subr.mxu0 0.0
      %1800 = vmatpush1.msra.mxu0 0.0
      %1801 = vmatprep.subr.mxu0 0.0
      %1802 = vmatpush1.msra.mxu0 0.0
      %1803 = vmatprep.subr.mxu0 0.0
      %1804 = vmatpush1.msra.mxu0 0.0
      %1805 = vmatprep.subr.mxu0 0.0
      %1806 = vmatpush1.msra.mxu0 0.0
      %1807 = vmatprep.subr.mxu0 0.0
      %1808 = vmatpush1.msra.mxu0 0.0
      %1809 = vmatprep.subr.mxu0 0.0
      %1810 = vmatpush1.msra.mxu0 0.0
      %1811 = vmatprep.subr.mxu0 0.0
      %1812 = vmatpush1.msra.mxu0 0.0
      %1813 = vmatprep.subr.mxu0 0.0
      %1814 = vmatpush1.msra.mxu0 0.0
      %1815 = vmatprep.subr.mxu0 0.0
      %1816 = vmatpush1.msra.mxu0 0.0
      %1817 = vmatprep.subr.mxu0 0.0
      %1818 = vmatpush1.msra.mxu0 0.0
      %1819 = vmatprep.subr.mxu0 0.0
      %1820 = vmatpush1.msra.mxu0 0.0
      %1821 = vmatprep.subr.mxu0 0.0
      %1822 = vmatpush1.msra.mxu0 0.0
      %1823 = vmatprep.subr.mxu0 0.0
      %1824 = vmatpush1.msra.mxu0 0.0
      %1825 = vmatprep.subr.mxu0 0.0
      %1826 = vmatpush1.msra.mxu0 0.0
      %1827 = vmatprep.subr.mxu0 0.0
      %1828 = vmatpush1.msra.mxu0 0.0
      %1829 = vmatprep.mubr.f32.mxu0 0.0
      %1830 = vmatmul.mubr.f32.gmra.mrb[0].mxu0 %v1763
      %v1831 = vpop.f32.mrb[0].mxu0
      %v1832 = vadd.f32 0.0, %v1831
      %v1833 = vpop.f32.mrb[0].mxu0
      %1834 = vdwg.mxu0
      %1836 = vrot.lane.b32.xlu0 %v1832, 16
      %v1837 = vpop.permute.xlu0 %1836
      %1839 = vst.msk [vmem:[#allocation2] sm:$0xff] %vm1210, %v1837
      %v1840 = vld [vmem:[#allocation2] sm:$0xff]
      %v1841 = vld [vmem:[%s12] sm:$0xff]
      %v1842 = vld [vmem:[%s12 + $0x8] sm:$0xff]
      %v1843 = vld [vmem:[%s12 + $0x10] sm:$0xff]
      %v1844 = vld [vmem:[%s12 + $0x18] sm:$0xff]
      %v1845 = vld [vmem:[%s13] sm:$0x1]
      %v1847 = vlaneseq
      %v1848 = vshrl.u32 %v1847, 7
      %v1849 = vsub.s32 0, %v1848
      %v1850 = vrot.slane %v1845, %v1849
      %v1853 = vsel %vm796, %v1840, 0
      %1855 = vmatprep.subr.mxu0 0.0
      %1856 = vmatpush1.msra.mxu0 %v1841
      %1857 = vmatprep.subr.mxu0 0.0
      %1858 = vmatpush1.msra.mxu0 %v1842
      %1859 = vmatprep.subr.mxu0 0.0
      %1860 = vmatpush1.msra.mxu0 %v1843
      %1861 = vmatprep.subr.mxu0 0.0
      %1862 = vmatpush1.msra.mxu0 %v1844
      %1863 = vmatprep.subr.mxu0 0.0
      %1864 = vmatpush1.msra.mxu0 0.0
      %1865 = vmatprep.subr.mxu0 0.0
      %1866 = vmatpush1.msra.mxu0 0.0
      %1867 = vmatprep.subr.mxu0 0.0
      %1868 = vmatpush1.msra.mxu0 0.0
      %1869 = vmatprep.subr.mxu0 0.0
      %1870 = vmatpush1.msra.mxu0 0.0
      %1871 = vmatprep.subr.mxu0 0.0
      %1872 = vmatpush1.msra.mxu0 0.0
      %1873 = vmatprep.subr.mxu0 0.0
      %1874 = vmatpush1.msra.mxu0 0.0
      %1875 = vmatprep.subr.mxu0 0.0
      %1876 = vmatpush1.msra.mxu0 0.0
      %1877 = vmatprep.subr.mxu0 0.0
      %1878 = vmatpush1.msra.mxu0 0.0
      %1879 = vmatprep.subr.mxu0 0.0
      %1880 = vmatpush1.msra.mxu0 0.0
      %1881 = vmatprep.subr.mxu0 0.0
      %1882 = vmatpush1.msra.mxu0 0.0
      %1883 = vmatprep.subr.mxu0 0.0
      %1884 = vmatpush1.msra.mxu0 0.0
      %1885 = vmatprep.subr.mxu0 0.0
      %1886 = vmatpush1.msra.mxu0 0.0
      %1887 = vmatprep.subr.mxu0 0.0
      %1888 = vmatpush1.msra.mxu0 0.0
      %1889 = vmatprep.subr.mxu0 0.0
      %1890 = vmatpush1.msra.mxu0 0.0
      %1891 = vmatprep.subr.mxu0 0.0
      %1892 = vmatpush1.msra.mxu0 0.0
      %1893 = vmatprep.subr.mxu0 0.0
      %1894 = vmatpush1.msra.mxu0 0.0
      %1895 = vmatprep.subr.mxu0 0.0
      %1896 = vmatpush1.msra.mxu0 0.0
      %1897 = vmatprep.subr.mxu0 0.0
      %1898 = vmatpush1.msra.mxu0 0.0
      %1899 = vmatprep.subr.mxu0 0.0
      %1900 = vmatpush1.msra.mxu0 0.0
      %1901 = vmatprep.subr.mxu0 0.0
      %1902 = vmatpush1.msra.mxu0 0.0
      %1903 = vmatprep.subr.mxu0 0.0
      %1904 = vmatpush1.msra.mxu0 0.0
      %1905 = vmatprep.subr.mxu0 0.0
      %1906 = vmatpush1.msra.mxu0 0.0
      %1907 = vmatprep.subr.mxu0 0.0
      %1908 = vmatpush1.msra.mxu0 0.0
      %1909 = vmatprep.subr.mxu0 0.0
      %1910 = vmatpush1.msra.mxu0 0.0
      %1911 = vmatprep.subr.mxu0 0.0
      %1912 = vmatpush1.msra.mxu0 0.0
      %1913 = vmatprep.subr.mxu0 0.0
      %1914 = vmatpush1.msra.mxu0 0.0
      %1915 = vmatprep.subr.mxu0 0.0
      %1916 = vmatpush1.msra.mxu0 0.0
      %1917 = vmatprep.subr.mxu0 0.0
      %1918 = vmatpush1.msra.mxu0 0.0
      %1919 = vmatprep.mubr.f32.mxu0 0.0
      %1920 = vmatmul.mubr.f32.gmra.mrb[0].mxu0 %v1853
      %v1921 = vpop.f32.mrb[0].mxu0
      %v1922 = vadd.f32 %v1850, %v1921
      %v1923 = vpop.f32.mrb[0].mxu0
      %1924 = vdwg.mxu0
      %v1925 = vadd.f32 %v1327, %v1922
      %v1926 = vsel %vm796, %v1925, 0.0
      %1927 = vadd.xlane.f32.xlu0 %v1926
      %v1928 = vpop.xlane.xlu0 %1927
      %v1929 = vmul.f32 %v1928, %v1301
      %v1930 = vsub.f32 %v1925, %v1929
      %v1931 = vmul.f32 %v1930, %v1930
      %v1932 = vsel %vm796, %v1931, 0.0
      %1933 = vadd.xlane.f32.xlu0 %v1932
      %v1934 = vpop.xlane.xlu0 %1933
      %v1935 = vmul.f32 %v1934, %v1301
      %v1936 = vadd.f32 %v1935, 1e-05
      %v1937 = vrsqrt.pop %v1936
      %v1938 = vmul.f32 %v1930, %v1937
      %v1939 = vld [vmem:[%s20] sm:$0x1]
      %v1941 = vlaneseq
      %v1942 = vshrl.u32 %v1941, 7
      %v1943 = vsub.s32 0, %v1942
      %v1944 = vrot.slane %v1939, %v1943
      %v1946 = vmul.f32 %v1938, %v1944
      %v1947 = vld [vmem:[%s21] sm:$0x1]
      %v1949 = vlaneseq
      %v1950 = vshrl.u32 %v1949, 7
      %v1951 = vsub.s32 0, %v1950
      %v1952 = vrot.slane %v1947, %v1951
      %v1954 = vadd.f32 %v1946, %v1952
      %v1955 = vld [vmem:[%s14] sm:$0xff]
      %v1956 = vld [vmem:[%s14 + $0x8] sm:$0xff]
      %v1957 = vld [vmem:[%s14 + $0x10] sm:$0xff]
      %v1958 = vld [vmem:[%s14 + $0x18] sm:$0xff]
      %v1959 = vld [vmem:[%s15] sm:$0x1]
      %v1961 = vlaneseq
      %v1962 = vshrl.u32 %v1961, 7
      %v1963 = vsub.s32 0, %v1962
      %v1964 = vrot.slane %v1959, %v1963
      %v1967 = vsel %vm796, %v1954, 0
      %1969 = vmatprep.subr.mxu0 0.0
      %1970 = vmatpush1.msra.mxu0 %v1955
      %1971 = vmatprep.subr.mxu0 0.0
      %1972 = vmatpush1.msra.mxu0 %v1956
      %1973 = vmatprep.subr.mxu0 0.0
      %1974 = vmatpush1.msra.mxu0 %v1957
      %1975 = vmatprep.subr.mxu0 0.0
      %1976 = vmatpush1.msra.mxu0 %v1958
      %1977 = vmatprep.subr.mxu0 0.0
      %1978 = vmatpush1.msra.mxu0 0.0
      %1979 = vmatprep.subr.mxu0 0.0
      %1980 = vmatpush1.msra.mxu0 0.0
      %1981 = vmatprep.subr.mxu0 0.0
      %1982 = vmatpush1.msra.mxu0 0.0
      %1983 = vmatprep.subr.mxu0 0.0
      %1984 = vmatpush1.msra.mxu0 0.0
      %1985 = vmatprep.subr.mxu0 0.0
      %1986 = vmatpush1.msra.mxu0 0.0
      %1987 = vmatprep.subr.mxu0 0.0
      %1988 = vmatpush1.msra.mxu0 0.0
      %1989 = vmatprep.subr.mxu0 0.0
      %1990 = vmatpush1.msra.mxu0 0.0
      %1991 = vmatprep.subr.mxu0 0.0
      %1992 = vmatpush1.msra.mxu0 0.0
      %1993 = vmatprep.subr.mxu0 0.0
      %1994 = vmatpush1.msra.mxu0 0.0
      %1995 = vmatprep.subr.mxu0 0.0
      %1996 = vmatpush1.msra.mxu0 0.0
      %1997 = vmatprep.subr.mxu0 0.0
      %1998 = vmatpush1.msra.mxu0 0.0
      %1999 = vmatprep.subr.mxu0 0.0
      %2000 = vmatpush1.msra.mxu0 0.0
      %2001 = vmatprep.subr.mxu0 0.0
      %2002 = vmatpush1.msra.mxu0 0.0
      %2003 = vmatprep.subr.mxu0 0.0
      %2004 = vmatpush1.msra.mxu0 0.0
      %2005 = vmatprep.subr.mxu0 0.0
      %2006 = vmatpush1.msra.mxu0 0.0
      %2007 = vmatprep.subr.mxu0 0.0
      %2008 = vmatpush1.msra.mxu0 0.0
      %2009 = vmatprep.subr.mxu0 0.0
      %2010 = vmatpush1.msra.mxu0 0.0
      %2011 = vmatprep.subr.mxu0 0.0
      %2012 = vmatpush1.msra.mxu0 0.0
      %2013 = vmatprep.subr.mxu0 0.0
      %2014 = vmatpush1.msra.mxu0 0.0
      %2015 = vmatprep.subr.mxu0 0.0
      %2016 = vmatpush1.msra.mxu0 0.0
      %2017 = vmatprep.subr.mxu0 0.0
      %2018 = vmatpush1.msra.mxu0 0.0
      %2019 = vmatprep.subr.mxu0 0.0
      %2020 = vmatpush1.msra.mxu0 0.0
      %2021 = vmatprep.subr.mxu0 0.0
      %2022 = vmatpush1.msra.mxu0 0.0
      %2023 = vmatprep.subr.mxu0 0.0
      %2024 = vmatpush1.msra.mxu0 0.0
      %2025 = vmatprep.subr.mxu0 0.0
      %2026 = vmatpush1.msra.mxu0 0.0
      %2027 = vmatprep.subr.mxu0 0.0
      %2028 = vmatpush1.msra.mxu0 0.0
      %2029 = vmatprep.subr.mxu0 0.0
      %2030 = vmatpush1.msra.mxu0 0.0
      %2031 = vmatprep.subr.mxu0 0.0
      %2032 = vmatpush1.msra.mxu0 0.0
      %2033 = vmatprep.mubr.f32.mxu0 0.0
      %2034 = vmatmul.mubr.f32.gmra.mrb[0].mxu0 %v1967
      %v2035 = vpop.f32.mrb[0].mxu0
      %v2036 = vadd.f32 %v1964, %v2035
      %v2037 = vpop.f32.mrb[0].mxu0
      %2038 = vdwg.mxu0
      %v2039 = vmax.f32 %v2036, 0.0
      %v2040 = vld [vmem:[%s16] sm:$0xff]
      %v2041 = vld [vmem:[%s16 + $0x8] sm:$0xff]
      %v2042 = vld [vmem:[%s16 + $0x10] sm:$0xff]
      %v2043 = vld [vmem:[%s16 + $0x18] sm:$0xff]
      %v2044 = vld [vmem:[%s16 + $0x20] sm:$0xff]
      %v2045 = vld [vmem:[%s16 + $0x28] sm:$0xff]
      %v2046 = vld [vmem:[%s16 + $0x30] sm:$0xff]
      %v2047 = vld [vmem:[%s16 + $0x38] sm:$0xff]
      %v2048 = vld [vmem:[%s17] sm:$0x1]
      %v2050 = vlaneseq
      %v2051 = vshrl.u32 %v2050, 7
      %v2052 = vsub.s32 0, %v2051
      %v2053 = vrot.slane %v2048, %v2052
      %vm2055 = vcmask 523264
      %v2057 = vsel %vm2055, %v2039, 0
      %2059 = vmatprep.subr.mxu0 0.0
      %2060 = vmatpush1.msra.mxu0 %v2040
      %2061 = vmatprep.subr.mxu0 0.0
      %2062 = vmatpush1.msra.mxu0 %v2041
      %2063 = vmatprep.subr.mxu0 0.0
      %2064 = vmatpush1.msra.mxu0 %v2042
      %2065 = vmatprep.subr.mxu0 0.0
      %2066 = vmatpush1.msra.mxu0 %v2043
      %2067 = vmatprep.subr.mxu0 0.0
      %2068 = vmatpush1.msra.mxu0 %v2044
      %2069 = vmatprep.subr.mxu0 0.0
      %2070 = vmatpush1.msra.mxu0 %v2045
      %2071 = vmatprep.subr.mxu0 0.0
      %2072 = vmatpush1.msra.mxu0 %v2046
      %2073 = vmatprep.subr.mxu0 0.0
      %2074 = vmatpush1.msra.mxu0 %v2047
      %2075 = vmatprep.subr.mxu0 0.0
      %2076 = vmatpush1.msra.mxu0 0.0
      %2077 = vmatprep.subr.mxu0 0.0
      %2078 = vmatpush1.msra.mxu0 0.0
      %2079 = vmatprep.subr.mxu0 0.0
      %2080 = vmatpush1.msra.mxu0 0.0
      %2081 = vmatprep.subr.mxu0 0.0
      %2082 = vmatpush1.msra.mxu0 0.0
      %2083 = vmatprep.subr.mxu0 0.0
      %2084 = vmatpush1.msra.mxu0 0.0
      %2085 = vmatprep.subr.mxu0 0.0
      %2086 = vmatpush1.msra.mxu0 0.0
      %2087 = vmatprep.subr.mxu0 0.0
      %2088 = vmatpush1.msra.mxu0 0.0
      %2089 = vmatprep.subr.mxu0 0.0
      %2090 = vmatpush1.msra.mxu0 0.0
      %2091 = vmatprep.subr.mxu0 0.0
      %2092 = vmatpush1.msra.mxu0 0.0
      %2093 = vmatprep.subr.mxu0 0.0
      %2094 = vmatpush1.msra.mxu0 0.0
      %2095 = vmatprep.subr.mxu0 0.0
      %2096 = vmatpush1.msra.mxu0 0.0
      %2097 = vmatprep.subr.mxu0 0.0
      %2098 = vmatpush1.msra.mxu0 0.0
      %2099 = vmatprep.subr.mxu0 0.0
      %2100 = vmatpush1.msra.mxu0 0.0
      %2101 = vmatprep.subr.mxu0 0.0
      %2102 = vmatpush1.msra.mxu0 0.0
      %2103 = vmatprep.subr.mxu0 0.0
      %2104 = vmatpush1.msra.mxu0 0.0
      %2105 = vmatprep.subr.mxu0 0.0
      %2106 = vmatpush1.msra.mxu0 0.0
      %2107 = vmatprep.subr.mxu0 0.0
      %2108 = vmatpush1.msra.mxu0 0.0
      %2109 = vmatprep.subr.mxu0 0.0
      %2110 = vmatpush1.msra.mxu0 0.0
      %2111 = vmatprep.subr.mxu0 0.0
      %2112 = vmatpush1.msra.mxu0 0.0
      %2113 = vmatprep.subr.mxu0 0.0
      %2114 = vmatpush1.msra.mxu0 0.0
      %2115 = vmatprep.subr.mxu0 0.0
      %2116 = vmatpush1.msra.mxu0 0.0
      %2117 = vmatprep.subr.mxu0 0.0
      %2118 = vmatpush1.msra.mxu0 0.0
      %2119 = vmatprep.subr.mxu0 0.0
      %2120 = vmatpush1.msra.mxu0 0.0
      %2121 = vmatprep.subr.mxu0 0.0
      %2122 = vmatpush1.msra.mxu0 0.0
      %2123 = vmatprep.mubr.f32.mxu0 0.0
      %2124 = vmatmul.mubr.f32.gmra.mrb[0].mxu0 %v2057
      %v2125 = vpop.f32.mrb[0].mxu0
      %v2126 = vadd.f32 %v2053, %v2125
      %v2127 = vpop.f32.mrb[0].mxu0
      %2128 = vdwg.mxu0
      %v2129 = vadd.f32 %v1954, %v2126
      %v2130 = vsel %vm796, %v2129, 0.0
      %2131 = vadd.xlane.f32.xlu0 %v2130
      %v2132 = vpop.xlane.xlu0 %2131
      %v2133 = vmul.f32 %v2132, %v1301
      %v2134 = vsub.f32 %v2129, %v2133
      %v2135 = vmul.f32 %v2134, %v2134
      %v2136 = vsel %vm796, %v2135, 0.0
      %2137 = vadd.xlane.f32.xlu0 %v2136
      %v2138 = vpop.xlane.xlu0 %2137
      %v2139 = vmul.f32 %v2138, %v1301
      %v2140 = vadd.f32 %v2139, 1e-05
      %v2141 = vrsqrt.pop %v2140
      %v2142 = vmul.f32 %v2134, %v2141
      %v2143 = vld [vmem:[%s22] sm:$0x1]
      %v2145 = vlaneseq
      %v2146 = vshrl.u32 %v2145, 7
      %v2147 = vsub.s32 0, %v2146
      %v2148 = vrot.slane %v2143, %v2147
      %v2150 = vmul.f32 %v2142, %v2148
      %v2151 = vld [vmem:[%s23] sm:$0x1]
      %v2153 = vlaneseq
      %v2154 = vshrl.u32 %v2153, 7
      %v2155 = vsub.s32 0, %v2154
      %v2156 = vrot.slane %v2151, %v2155
      %v2158 = vadd.f32 %v2150, %v2156
      %2159 = vst.msk [vmem:[%s780] sm:$0xff] %vm796, %v2158
      %p2160 = scmp.lt.s32.totalorder %s35, 1
      %s2161 = scalar_select %p2160, %s35, 1
      %s2162 = smul.addr %s2161, 8
      %s2163 = scalar_lea.vmem %s24, %s2162
      // Predicated region
      $region117: #{transformer_decoder_forward.4} parent=115 // pred_check
        %p2164 = pneg %p577
      $region118: #{transformer_decoder_forward.4} parent=115 // pred_check_branch
        %2166 = sbr.rel (%p2164) target = $region120
      $region119: #{transformer_decoder_forward.4} parent=115 // pred_region
        _
      $region120: #{transformer_decoder_forward.4} parent=115 // pred_fallthru
        _
    $region116: #{transformer_decoder_forward.4} parent=5 // pred_fallthru
      _
    %p2167 = scmp.le.s32.totalorder 2, %s30
    // Predicated region
    $region121: #{transformer_decoder_forward.4} parent=5 // pred_check
      %p2168 = pneg %p2167
    $region122: #{transformer_decoder_forward.4} parent=5 // pred_check_branch
      %2170 = sbr.rel (%p2168) target = $region124
    $region123: #{transformer_decoder_forward.4} parent=5 // pred_region
      %s2171 = ssub.s32 %s30, 2
      // Predicated region
      $region125: #{transformer_decoder_forward.4} parent=123 // pred_check
        %p2172 = pneg %p583
      $region126: #{transformer_decoder_forward.4} parent=123 // pred_check_branch
        %2174 = sbr.rel (%p2172) target = $region128
      $region127: #{transformer_decoder_forward.4} parent=123 // pred_region
        %p2175 = scmp.lt.s32.totalorder %s36, 1
        %s2176 = scalar_select %p2175, %s36, 1
        %s2177 = smul.addr %s2176, 8
        %s2178 = scalar_lea.vmem %s24, %s2177
      $region128: #{transformer_decoder_forward.4} parent=123 // pred_fallthru
        _
    $region124: #{transformer_decoder_forward.4} parent=5 // pred_fallthru
      _
  $region6: #{transformer_decoder_forward.4} parent=0 // loop_footer
    %s34 = sadd.s32 1, %s30
  $region7: #{transformer_decoder_forward.4} parent=0 // loop_footer_branch
    %29 = sbr.rel target = $region3
  $region8: #{transformer_decoder_forward.4} parent=0 // loop_exit
    _

</llo_original>
